<compile_context>
chip_gen: v7x
topology: tpu7x:2x2x1
jax: 0.10.0
libtpu: 0.0.40
codegen_flags: <defaults>
</compile_context>

<pallas_src>
import jax
import jax.numpy as jnp
from jax.experimental import pallas as pl
from jax.experimental.pallas import tpu as pltpu

_LANES = 128
_EPS = 1e-5


def _gn_kernel(x_ref, wg_ref, wq_ref, wo_ref, bg_ref, bq_ref, out_ref):
    """One (1, C, t_s, 128) tile of NCHW pixels (pixels dense on sublane x lane).

    x_ref  : (1, C, t_s, 128) VMEM
    wg_ref : (Cr, C) SMEM  -- g-projection weights with LN scale folded in
    wq_ref : (Cr, C) SMEM  -- q-projection weights with LN scale folded in
    wo_ref : (C, Cr) SMEM  -- output projection weights
    bg_ref : (Cr,)   SMEM  -- LN bias folded through the g projection
    bq_ref : (Cr,)   SMEM  -- LN bias folded through the q projection
    """
    C = x_ref.shape[1]
    Cr = wg_ref.shape[0]
    inv_c = 1.0 / C

    # Per-channel dense (t_s, 128) slabs -> full vreg occupancy everywhere.
    xc = [x_ref[0, c].astype(jnp.float32) for c in range(C)]

    # LayerNorm stats over channels (single pass): var = E[x^2] - mu^2.
    s1 = xc[0]
    s2 = xc[0] * xc[0]
    for c in range(1, C):
        s1 = s1 + xc[c]
        s2 = s2 + xc[c] * xc[c]
    mu = s1 * inv_c
    var = s2 * inv_c - mu * mu
    inv = jax.lax.rsqrt(var + _EPS)            # EUP rsqrt, not a VALU divide
    zc = [(xc[c] - mu) * inv for c in range(C)]

    # g / q 1x1 convs as unrolled VPU broadcast-FMAs over the tiny channel dims.
    # LN affine already folded into (wg, bg) / (wq, bq).
    # NOTE: gelu(g) in the PyTorch forward is dead code (overwritten) -> omitted.
    gq = []
    for co in range(Cr):
        g = bg_ref[co] + wg_ref[co, 0] * zc[0]
        q = bq_ref[co] + wq_ref[co, 0] * zc[0]
        for ci in range(1, C):
            g = g + wg_ref[co, ci] * zc[ci]
            q = q + wq_ref[co, ci] * zc[ci]
        gq.append(g * q)

    # Output projection + residual with the ORIGINAL (pre-LN) input.
    for c in range(C):
        o = wo_ref[c, 0] * gq[0]
        for co in range(1, Cr):
            o = o + wo_ref[c, co] * gq[co]
        out_ref[0, c] = (xc[c] + o).astype(out_ref.dtype)


def gn_forward(x_nchw, ln_w, ln_b, w_g, w_q, w_o, *, max_rows=256):
    """x_nchw: (B, C, H, W). w_g/w_q: (Cr, C); w_o: (C, Cr) (1x1 kernels squeezed)."""
    B, C, H, W = x_nchw.shape
    HW = H * W
    f32 = jnp.float32

    # Fold LN affine into the g/q projections:
    #   Wg @ (ln_w * x_hat + ln_b) = (Wg * ln_w) @ x_hat + (Wg @ ln_b)
    ln_w32 = ln_w.astype(f32)
    ln_b32 = ln_b.astype(f32)
    wg_eff = w_g.astype(f32) * ln_w32[None, :]     # (Cr, C)
    wq_eff = w_q.astype(f32) * ln_w32[None, :]     # (Cr, C)
    bg = w_g.astype(f32) @ ln_b32                  # (Cr,)
    bq = w_q.astype(f32) @ ln_b32                  # (Cr,)
    wo_f = w_o.astype(f32)                         # (C, Cr)

    # Lay H*W pixels out over (sublane-rows, 128 lanes). All reshapes are free
    # (no transposes); padding only happens for ragged spatial sizes.
    S = -(-HW // _LANES)                           # sublane rows of 128 pixels
    if S <= max_rows:
        t_s = S                                    # whole image per grid step
        s_pad = S
    else:
        t_s = max_rows                             # multiple of 8
        s_pad = -(-S // t_s) * t_s
    hw_pad = s_pad * _LANES

    x3 = x_nchw.reshape(B, C, HW)
    if hw_pad != HW:
        # TODO(synk): rare ragged tail handled by zero-pad + slice; padded pixels
        # compute harmless values (var=0 -> rsqrt(eps)) and are dropped below.
        x3 = jnp.pad(x3, ((0, 0), (0, 0), (0, hw_pad - HW)))
    x4 = x3.reshape(B, C, s_pad, _LANES)

    smem = pl.BlockSpec(memory_space=pltpu.MemorySpace.SMEM)
    out4 = pl.pallas_call(
        _gn_kernel,
        out_shape=jax.ShapeDtypeStruct((B, C, s_pad, _LANES), x_nchw.dtype),
        grid_spec=pltpu.PrefetchScalarGridSpec(
            num_scalar_prefetch=0,
            grid=(B, s_pad // t_s),
            in_specs=[
                pl.BlockSpec((1, C, t_s, _LANES), lambda b, s: (b, 0, s, 0)),
                smem, smem, smem, smem, smem,
            ],
            out_specs=pl.BlockSpec((1, C, t_s, _LANES), lambda b, s: (b, 0, s, 0)),
        ),
        compiler_params=pltpu.CompilerParams(
            dimension_semantics=("parallel", "parallel")),
    )(x4, wg_eff, wq_eff, wo_f, bg, bq)

    out = out4.reshape(B, C, hw_pad)[:, :, :HW].reshape(B, C, H, W)
    return out


def gn_reference(x, ln_w, ln_b, w_g, w_q, w_o):
    """Pure-JAX reference mirroring the PyTorch forward (GELU result is dead code)."""
    xf = x.astype(jnp.float32)
    mu = xf.mean(axis=1, keepdims=True)
    var = ((xf - mu) ** 2).mean(axis=1, keepdims=True)
    xn = (xf - mu) / jnp.sqrt(var + _EPS)
    xn = xn * ln_w[None, :, None, None] + ln_b[None, :, None, None]
    g = jnp.einsum('oc,bchw->bohw', w_g.astype(jnp.float32), xn)
    q = jnp.einsum('oc,bchw->bohw', w_q.astype(jnp.float32), xn)
    o = jnp.einsum('co,bohw->bchw', w_o.astype(jnp.float32), g * q)
    return (xf + o).astype(x.dtype)


if __name__ == "__main__":
    key = jax.random.PRNGKey(0)
    B, C, H, W = 2, 4, 16, 16      # num_spectral = 4
    r = 2
    Cr = int(C * r)

    k_x, k_g, k_q, k_o = jax.random.split(key, 4)
    x = jax.random.normal(k_x, (B, C, H, W), dtype=jnp.float32)

    # LN params: torch.ones(dim) for both weight and bias.
    ln_w = jnp.ones((C,), jnp.float32)
    ln_b = jnp.ones((C,), jnp.float32)

    # 1x1 conv weights (bias=False), kernels squeezed to (Cout, Cin).
    w_g = jax.random.normal(k_g, (Cr, C), dtype=jnp.float32) * 0.1
    w_q = jax.random.normal(k_q, (Cr, C), dtype=jnp.float32) * 0.1
    w_o = jax.random.normal(k_o, (C, Cr), dtype=jnp.float32) * 0.1

    out = jax.jit(gn_forward)(x, ln_w, ln_b, w_g, w_q, w_o)
    out = jax.block_until_ready(out)

    ref = gn_reference(x, ln_w, ln_b, w_g, w_q, w_o)
    assert out.shape == (B, C, H, W)
    assert jnp.allclose(out, ref, atol=1e-4, rtol=1e-4), float(jnp.max(jnp.abs(out - ref)))

    print("KERNEL_OK")
</pallas_src>

<mosaic_0001>
module attributes {stable_mosaic.version = 11 : i64} {
  func.func @_gn_kernel(%arg0: i32, %arg1: i32, %arg2: memref<1x4x2x128xf32, #tpu.memory_space<vmem>>, %arg3: memref<8x4xf32, #tpu.memory_space<smem>>, %arg4: memref<8x4xf32, #tpu.memory_space<smem>>, %arg5: memref<4x8xf32, #tpu.memory_space<smem>>, %arg6: memref<8xf32, #tpu.memory_space<smem>>, %arg7: memref<8xf32, #tpu.memory_space<smem>>, %arg8: memref<1x4x2x128xf32, #tpu.memory_space<vmem>>) attributes {dimension_semantics = [#tpu.dimension_semantics<parallel>, #tpu.dimension_semantics<parallel>], iteration_bounds = array<i64: 2, 1>, scalar_prefetch = 0 : i64, scratch_operands = 0 : i64, tpu.core_type = #tpu.core_type<tc>, window_params = [{transform_indices = @transform_0, window_bounds = array<i64: 1, 4, 2, 128>}, {transform_indices = @transform_1, window_bounds = array<i64: 8, 4>}, {transform_indices = @transform_2, window_bounds = array<i64: 8, 4>}, {transform_indices = @transform_3, window_bounds = array<i64: 4, 8>}, {transform_indices = @transform_4, window_bounds = array<i64: 8>}, {transform_indices = @transform_5, window_bounds = array<i64: 8>}, {transform_indices = @transform_6, window_bounds = array<i64: 1, 4, 2, 128>}]} {
    %c0 = arith.constant 0 : index
    %c0_0 = arith.constant 0 : index
    %c0_1 = arith.constant 0 : index
    %c0_2 = arith.constant 0 : index
    %0 = vector.load %arg2[%c0, %c0_0, %c0_1, %c0_2] : memref<1x4x2x128xf32, #tpu.memory_space<vmem>>, vector<1x1x2x128xf32>
    %1 = vector.shape_cast %0 : vector<1x1x2x128xf32> to vector<2x128xf32>
    %c0_3 = arith.constant 0 : index
    %c1 = arith.constant 1 : index
    %c0_4 = arith.constant 0 : index
    %c0_5 = arith.constant 0 : index
    %2 = vector.load %arg2[%c0_3, %c1, %c0_4, %c0_5] : memref<1x4x2x128xf32, #tpu.memory_space<vmem>>, vector<1x1x2x128xf32>
    %3 = vector.shape_cast %2 : vector<1x1x2x128xf32> to vector<2x128xf32>
    %c0_6 = arith.constant 0 : index
    %c2 = arith.constant 2 : index
    %c0_7 = arith.constant 0 : index
    %c0_8 = arith.constant 0 : index
    %4 = vector.load %arg2[%c0_6, %c2, %c0_7, %c0_8] : memref<1x4x2x128xf32, #tpu.memory_space<vmem>>, vector<1x1x2x128xf32>
    %5 = vector.shape_cast %4 : vector<1x1x2x128xf32> to vector<2x128xf32>
    %c0_9 = arith.constant 0 : index
    %c3 = arith.constant 3 : index
    %c0_10 = arith.constant 0 : index
    %c0_11 = arith.constant 0 : index
    %6 = vector.load %arg2[%c0_9, %c3, %c0_10, %c0_11] : memref<1x4x2x128xf32, #tpu.memory_space<vmem>>, vector<1x1x2x128xf32>
    %7 = vector.shape_cast %6 : vector<1x1x2x128xf32> to vector<2x128xf32>
    %8 = arith.mulf %1, %1 : vector<2x128xf32>
    %9 = arith.addf %1, %3 : vector<2x128xf32>
    %10 = arith.mulf %3, %3 : vector<2x128xf32>
    %11 = arith.addf %8, %10 : vector<2x128xf32>
    %12 = arith.addf %9, %5 : vector<2x128xf32>
    %13 = arith.mulf %5, %5 : vector<2x128xf32>
    %14 = arith.addf %11, %13 : vector<2x128xf32>
    %15 = arith.addf %12, %7 : vector<2x128xf32>
    %16 = arith.mulf %7, %7 : vector<2x128xf32>
    %17 = arith.addf %14, %16 : vector<2x128xf32>
    %cst = arith.constant 2.500000e-01 : f32
    %18 = vector.broadcast %cst : f32 to vector<2x128xf32>
    %19 = arith.mulf %15, %18 : vector<2x128xf32>
    %cst_12 = arith.constant 2.500000e-01 : f32
    %20 = vector.broadcast %cst_12 : f32 to vector<2x128xf32>
    %21 = arith.mulf %17, %20 : vector<2x128xf32>
    %22 = arith.mulf %19, %19 : vector<2x128xf32>
    %23 = arith.subf %21, %22 : vector<2x128xf32>
    %cst_13 = arith.constant 9.99999974E-6 : f32
    %24 = vector.broadcast %cst_13 : f32 to vector<2x128xf32>
    %25 = arith.addf %23, %24 : vector<2x128xf32>
    %26 = math.rsqrt %25 : vector<2x128xf32>
    %27 = arith.subf %1, %19 : vector<2x128xf32>
    %28 = arith.mulf %27, %26 : vector<2x128xf32>
    %29 = arith.subf %3, %19 : vector<2x128xf32>
    %30 = arith.mulf %29, %26 : vector<2x128xf32>
    %31 = arith.subf %5, %19 : vector<2x128xf32>
    %32 = arith.mulf %31, %26 : vector<2x128xf32>
    %33 = arith.subf %7, %19 : vector<2x128xf32>
    %34 = arith.mulf %33, %26 : vector<2x128xf32>
    %c0_14 = arith.constant 0 : index
    %35 = memref.load %arg6[%c0_14] : memref<8xf32, #tpu.memory_space<smem>>
    %c0_15 = arith.constant 0 : index
    %c0_16 = arith.constant 0 : index
    %36 = memref.load %arg3[%c0_15, %c0_16] : memref<8x4xf32, #tpu.memory_space<smem>>
    %37 = vector.broadcast %36 : f32 to vector<2x128xf32>
    %38 = arith.mulf %37, %28 : vector<2x128xf32>
    %39 = vector.broadcast %35 : f32 to vector<2x128xf32>
    %40 = arith.addf %39, %38 : vector<2x128xf32>
    %c0_17 = arith.constant 0 : index
    %41 = memref.load %arg7[%c0_17] : memref<8xf32, #tpu.memory_space<smem>>
    %c0_18 = arith.constant 0 : index
    %c0_19 = arith.constant 0 : index
    %42 = memref.load %arg4[%c0_18, %c0_19] : memref<8x4xf32, #tpu.memory_space<smem>>
    %43 = vector.broadcast %42 : f32 to vector<2x128xf32>
    %44 = arith.mulf %43, %28 : vector<2x128xf32>
    %45 = vector.broadcast %41 : f32 to vector<2x128xf32>
    %46 = arith.addf %45, %44 : vector<2x128xf32>
    %c0_20 = arith.constant 0 : index
    %c1_21 = arith.constant 1 : index
    %47 = memref.load %arg3[%c0_20, %c1_21] : memref<8x4xf32, #tpu.memory_space<smem>>
    %48 = vector.broadcast %47 : f32 to vector<2x128xf32>
    %49 = arith.mulf %48, %30 : vector<2x128xf32>
    %50 = arith.addf %40, %49 : vector<2x128xf32>
    %c0_22 = arith.constant 0 : index
    %c1_23 = arith.constant 1 : index
    %51 = memref.load %arg4[%c0_22, %c1_23] : memref<8x4xf32, #tpu.memory_space<smem>>
    %52 = vector.broadcast %51 : f32 to vector<2x128xf32>
    %53 = arith.mulf %52, %30 : vector<2x128xf32>
    %54 = arith.addf %46, %53 : vector<2x128xf32>
    %c0_24 = arith.constant 0 : index
    %c2_25 = arith.constant 2 : index
    %55 = memref.load %arg3[%c0_24, %c2_25] : memref<8x4xf32, #tpu.memory_space<smem>>
    %56 = vector.broadcast %55 : f32 to vector<2x128xf32>
    %57 = arith.mulf %56, %32 : vector<2x128xf32>
    %58 = arith.addf %50, %57 : vector<2x128xf32>
    %c0_26 = arith.constant 0 : index
    %c2_27 = arith.constant 2 : index
    %59 = memref.load %arg4[%c0_26, %c2_27] : memref<8x4xf32, #tpu.memory_space<smem>>
    %60 = vector.broadcast %59 : f32 to vector<2x128xf32>
    %61 = arith.mulf %60, %32 : vector<2x128xf32>
    %62 = arith.addf %54, %61 : vector<2x128xf32>
    %c0_28 = arith.constant 0 : index
    %c3_29 = arith.constant 3 : index
    %63 = memref.load %arg3[%c0_28, %c3_29] : memref<8x4xf32, #tpu.memory_space<smem>>
    %64 = vector.broadcast %63 : f32 to vector<2x128xf32>
    %65 = arith.mulf %64, %34 : vector<2x128xf32>
    %66 = arith.addf %58, %65 : vector<2x128xf32>
    %c0_30 = arith.constant 0 : index
    %c3_31 = arith.constant 3 : index
    %67 = memref.load %arg4[%c0_30, %c3_31] : memref<8x4xf32, #tpu.memory_space<smem>>
    %68 = vector.broadcast %67 : f32 to vector<2x128xf32>
    %69 = arith.mulf %68, %34 : vector<2x128xf32>
    %70 = arith.addf %62, %69 : vector<2x128xf32>
    %71 = arith.mulf %66, %70 : vector<2x128xf32>
    %c1_32 = arith.constant 1 : index
    %72 = memref.load %arg6[%c1_32] : memref<8xf32, #tpu.memory_space<smem>>
    %c1_33 = arith.constant 1 : index
    %c0_34 = arith.constant 0 : index
    %73 = memref.load %arg3[%c1_33, %c0_34] : memref<8x4xf32, #tpu.memory_space<smem>>
    %74 = vector.broadcast %73 : f32 to vector<2x128xf32>
    %75 = arith.mulf %74, %28 : vector<2x128xf32>
    %76 = vector.broadcast %72 : f32 to vector<2x128xf32>
    %77 = arith.addf %76, %75 : vector<2x128xf32>
    %c1_35 = arith.constant 1 : index
    %78 = memref.load %arg7[%c1_35] : memref<8xf32, #tpu.memory_space<smem>>
    %c1_36 = arith.constant 1 : index
    %c0_37 = arith.constant 0 : index
    %79 = memref.load %arg4[%c1_36, %c0_37] : memref<8x4xf32, #tpu.memory_space<smem>>
    %80 = vector.broadcast %79 : f32 to vector<2x128xf32>
    %81 = arith.mulf %80, %28 : vector<2x128xf32>
    %82 = vector.broadcast %78 : f32 to vector<2x128xf32>
    %83 = arith.addf %82, %81 : vector<2x128xf32>
    %c1_38 = arith.constant 1 : index
    %c1_39 = arith.constant 1 : index
    %84 = memref.load %arg3[%c1_38, %c1_39] : memref<8x4xf32, #tpu.memory_space<smem>>
    %85 = vector.broadcast %84 : f32 to vector<2x128xf32>
    %86 = arith.mulf %85, %30 : vector<2x128xf32>
    %87 = arith.addf %77, %86 : vector<2x128xf32>
    %c1_40 = arith.constant 1 : index
    %c1_41 = arith.constant 1 : index
    %88 = memref.load %arg4[%c1_40, %c1_41] : memref<8x4xf32, #tpu.memory_space<smem>>
    %89 = vector.broadcast %88 : f32 to vector<2x128xf32>
    %90 = arith.mulf %89, %30 : vector<2x128xf32>
    %91 = arith.addf %83, %90 : vector<2x128xf32>
    %c1_42 = arith.constant 1 : index
    %c2_43 = arith.constant 2 : index
    %92 = memref.load %arg3[%c1_42, %c2_43] : memref<8x4xf32, #tpu.memory_space<smem>>
    %93 = vector.broadcast %92 : f32 to vector<2x128xf32>
    %94 = arith.mulf %93, %32 : vector<2x128xf32>
    %95 = arith.addf %87, %94 : vector<2x128xf32>
    %c1_44 = arith.constant 1 : index
    %c2_45 = arith.constant 2 : index
    %96 = memref.load %arg4[%c1_44, %c2_45] : memref<8x4xf32, #tpu.memory_space<smem>>
    %97 = vector.broadcast %96 : f32 to vector<2x128xf32>
    %98 = arith.mulf %97, %32 : vector<2x128xf32>
    %99 = arith.addf %91, %98 : vector<2x128xf32>
    %c1_46 = arith.constant 1 : index
    %c3_47 = arith.constant 3 : index
    %100 = memref.load %arg3[%c1_46, %c3_47] : memref<8x4xf32, #tpu.memory_space<smem>>
    %101 = vector.broadcast %100 : f32 to vector<2x128xf32>
    %102 = arith.mulf %101, %34 : vector<2x128xf32>
    %103 = arith.addf %95, %102 : vector<2x128xf32>
    %c1_48 = arith.constant 1 : index
    %c3_49 = arith.constant 3 : index
    %104 = memref.load %arg4[%c1_48, %c3_49] : memref<8x4xf32, #tpu.memory_space<smem>>
    %105 = vector.broadcast %104 : f32 to vector<2x128xf32>
    %106 = arith.mulf %105, %34 : vector<2x128xf32>
    %107 = arith.addf %99, %106 : vector<2x128xf32>
    %108 = arith.mulf %103, %107 : vector<2x128xf32>
    %c2_50 = arith.constant 2 : index
    %109 = memref.load %arg6[%c2_50] : memref<8xf32, #tpu.memory_space<smem>>
    %c2_51 = arith.constant 2 : index
    %c0_52 = arith.constant 0 : index
    %110 = memref.load %arg3[%c2_51, %c0_52] : memref<8x4xf32, #tpu.memory_space<smem>>
    %111 = vector.broadcast %110 : f32 to vector<2x128xf32>
    %112 = arith.mulf %111, %28 : vector<2x128xf32>
    %113 = vector.broadcast %109 : f32 to vector<2x128xf32>
    %114 = arith.addf %113, %112 : vector<2x128xf32>
    %c2_53 = arith.constant 2 : index
    %115 = memref.load %arg7[%c2_53] : memref<8xf32, #tpu.memory_space<smem>>
    %c2_54 = arith.constant 2 : index
    %c0_55 = arith.constant 0 : index
    %116 = memref.load %arg4[%c2_54, %c0_55] : memref<8x4xf32, #tpu.memory_space<smem>>
    %117 = vector.broadcast %116 : f32 to vector<2x128xf32>
    %118 = arith.mulf %117, %28 : vector<2x128xf32>
    %119 = vector.broadcast %115 : f32 to vector<2x128xf32>
    %120 = arith.addf %119, %118 : vector<2x128xf32>
    %c2_56 = arith.constant 2 : index
    %c1_57 = arith.constant 1 : index
    %121 = memref.load %arg3[%c2_56, %c1_57] : memref<8x4xf32, #tpu.memory_space<smem>>
    %122 = vector.broadcast %121 : f32 to vector<2x128xf32>
    %123 = arith.mulf %122, %30 : vector<2x128xf32>
    %124 = arith.addf %114, %123 : vector<2x128xf32>
    %c2_58 = arith.constant 2 : index
    %c1_59 = arith.constant 1 : index
    %125 = memref.load %arg4[%c2_58, %c1_59] : memref<8x4xf32, #tpu.memory_space<smem>>
    %126 = vector.broadcast %125 : f32 to vector<2x128xf32>
    %127 = arith.mulf %126, %30 : vector<2x128xf32>
    %128 = arith.addf %120, %127 : vector<2x128xf32>
    %c2_60 = arith.constant 2 : index
    %c2_61 = arith.constant 2 : index
    %129 = memref.load %arg3[%c2_60, %c2_61] : memref<8x4xf32, #tpu.memory_space<smem>>
    %130 = vector.broadcast %129 : f32 to vector<2x128xf32>
    %131 = arith.mulf %130, %32 : vector<2x128xf32>
    %132 = arith.addf %124, %131 : vector<2x128xf32>
    %c2_62 = arith.constant 2 : index
    %c2_63 = arith.constant 2 : index
    %133 = memref.load %arg4[%c2_62, %c2_63] : memref<8x4xf32, #tpu.memory_space<smem>>
    %134 = vector.broadcast %133 : f32 to vector<2x128xf32>
    %135 = arith.mulf %134, %32 : vector<2x128xf32>
    %136 = arith.addf %128, %135 : vector<2x128xf32>
    %c2_64 = arith.constant 2 : index
    %c3_65 = arith.constant 3 : index
    %137 = memref.load %arg3[%c2_64, %c3_65] : memref<8x4xf32, #tpu.memory_space<smem>>
    %138 = vector.broadcast %137 : f32 to vector<2x128xf32>
    %139 = arith.mulf %138, %34 : vector<2x128xf32>
    %140 = arith.addf %132, %139 : vector<2x128xf32>
    %c2_66 = arith.constant 2 : index
    %c3_67 = arith.constant 3 : index
    %141 = memref.load %arg4[%c2_66, %c3_67] : memref<8x4xf32, #tpu.memory_space<smem>>
    %142 = vector.broadcast %141 : f32 to vector<2x128xf32>
    %143 = arith.mulf %142, %34 : vector<2x128xf32>
    %144 = arith.addf %136, %143 : vector<2x128xf32>
    %145 = arith.mulf %140, %144 : vector<2x128xf32>
    %c3_68 = arith.constant 3 : index
    %146 = memref.load %arg6[%c3_68] : memref<8xf32, #tpu.memory_space<smem>>
    %c3_69 = arith.constant 3 : index
    %c0_70 = arith.constant 0 : index
    %147 = memref.load %arg3[%c3_69, %c0_70] : memref<8x4xf32, #tpu.memory_space<smem>>
    %148 = vector.broadcast %147 : f32 to vector<2x128xf32>
    %149 = arith.mulf %148, %28 : vector<2x128xf32>
    %150 = vector.broadcast %146 : f32 to vector<2x128xf32>
    %151 = arith.addf %150, %149 : vector<2x128xf32>
    %c3_71 = arith.constant 3 : index
    %152 = memref.load %arg7[%c3_71] : memref<8xf32, #tpu.memory_space<smem>>
    %c3_72 = arith.constant 3 : index
    %c0_73 = arith.constant 0 : index
    %153 = memref.load %arg4[%c3_72, %c0_73] : memref<8x4xf32, #tpu.memory_space<smem>>
    %154 = vector.broadcast %153 : f32 to vector<2x128xf32>
    %155 = arith.mulf %154, %28 : vector<2x128xf32>
    %156 = vector.broadcast %152 : f32 to vector<2x128xf32>
    %157 = arith.addf %156, %155 : vector<2x128xf32>
    %c3_74 = arith.constant 3 : index
    %c1_75 = arith.constant 1 : index
    %158 = memref.load %arg3[%c3_74, %c1_75] : memref<8x4xf32, #tpu.memory_space<smem>>
    %159 = vector.broadcast %158 : f32 to vector<2x128xf32>
    %160 = arith.mulf %159, %30 : vector<2x128xf32>
    %161 = arith.addf %151, %160 : vector<2x128xf32>
    %c3_76 = arith.constant 3 : index
    %c1_77 = arith.constant 1 : index
    %162 = memref.load %arg4[%c3_76, %c1_77] : memref<8x4xf32, #tpu.memory_space<smem>>
    %163 = vector.broadcast %162 : f32 to vector<2x128xf32>
    %164 = arith.mulf %163, %30 : vector<2x128xf32>
    %165 = arith.addf %157, %164 : vector<2x128xf32>
    %c3_78 = arith.constant 3 : index
    %c2_79 = arith.constant 2 : index
    %166 = memref.load %arg3[%c3_78, %c2_79] : memref<8x4xf32, #tpu.memory_space<smem>>
    %167 = vector.broadcast %166 : f32 to vector<2x128xf32>
    %168 = arith.mulf %167, %32 : vector<2x128xf32>
    %169 = arith.addf %161, %168 : vector<2x128xf32>
    %c3_80 = arith.constant 3 : index
    %c2_81 = arith.constant 2 : index
    %170 = memref.load %arg4[%c3_80, %c2_81] : memref<8x4xf32, #tpu.memory_space<smem>>
    %171 = vector.broadcast %170 : f32 to vector<2x128xf32>
    %172 = arith.mulf %171, %32 : vector<2x128xf32>
    %173 = arith.addf %165, %172 : vector<2x128xf32>
    %c3_82 = arith.constant 3 : index
    %c3_83 = arith.constant 3 : index
    %174 = memref.load %arg3[%c3_82, %c3_83] : memref<8x4xf32, #tpu.memory_space<smem>>
    %175 = vector.broadcast %174 : f32 to vector<2x128xf32>
    %176 = arith.mulf %175, %34 : vector<2x128xf32>
    %177 = arith.addf %169, %176 : vector<2x128xf32>
    %c3_84 = arith.constant 3 : index
    %c3_85 = arith.constant 3 : index
    %178 = memref.load %arg4[%c3_84, %c3_85] : memref<8x4xf32, #tpu.memory_space<smem>>
    %179 = vector.broadcast %178 : f32 to vector<2x128xf32>
    %180 = arith.mulf %179, %34 : vector<2x128xf32>
    %181 = arith.addf %173, %180 : vector<2x128xf32>
    %182 = arith.mulf %177, %181 : vector<2x128xf32>
    %c4 = arith.constant 4 : index
    %183 = memref.load %arg6[%c4] : memref<8xf32, #tpu.memory_space<smem>>
    %c4_86 = arith.constant 4 : index
    %c0_87 = arith.constant 0 : index
    %184 = memref.load %arg3[%c4_86, %c0_87] : memref<8x4xf32, #tpu.memory_space<smem>>
    %185 = vector.broadcast %184 : f32 to vector<2x128xf32>
    %186 = arith.mulf %185, %28 : vector<2x128xf32>
    %187 = vector.broadcast %183 : f32 to vector<2x128xf32>
    %188 = arith.addf %187, %186 : vector<2x128xf32>
    %c4_88 = arith.constant 4 : index
    %189 = memref.load %arg7[%c4_88] : memref<8xf32, #tpu.memory_space<smem>>
    %c4_89 = arith.constant 4 : index
    %c0_90 = arith.constant 0 : index
    %190 = memref.load %arg4[%c4_89, %c0_90] : memref<8x4xf32, #tpu.memory_space<smem>>
    %191 = vector.broadcast %190 : f32 to vector<2x128xf32>
    %192 = arith.mulf %191, %28 : vector<2x128xf32>
    %193 = vector.broadcast %189 : f32 to vector<2x128xf32>
    %194 = arith.addf %193, %192 : vector<2x128xf32>
    %c4_91 = arith.constant 4 : index
    %c1_92 = arith.constant 1 : index
    %195 = memref.load %arg3[%c4_91, %c1_92] : memref<8x4xf32, #tpu.memory_space<smem>>
    %196 = vector.broadcast %195 : f32 to vector<2x128xf32>
    %197 = arith.mulf %196, %30 : vector<2x128xf32>
    %198 = arith.addf %188, %197 : vector<2x128xf32>
    %c4_93 = arith.constant 4 : index
    %c1_94 = arith.constant 1 : index
    %199 = memref.load %arg4[%c4_93, %c1_94] : memref<8x4xf32, #tpu.memory_space<smem>>
    %200 = vector.broadcast %199 : f32 to vector<2x128xf32>
    %201 = arith.mulf %200, %30 : vector<2x128xf32>
    %202 = arith.addf %194, %201 : vector<2x128xf32>
    %c4_95 = arith.constant 4 : index
    %c2_96 = arith.constant 2 : index
    %203 = memref.load %arg3[%c4_95, %c2_96] : memref<8x4xf32, #tpu.memory_space<smem>>
    %204 = vector.broadcast %203 : f32 to vector<2x128xf32>
    %205 = arith.mulf %204, %32 : vector<2x128xf32>
    %206 = arith.addf %198, %205 : vector<2x128xf32>
    %c4_97 = arith.constant 4 : index
    %c2_98 = arith.constant 2 : index
    %207 = memref.load %arg4[%c4_97, %c2_98] : memref<8x4xf32, #tpu.memory_space<smem>>
    %208 = vector.broadcast %207 : f32 to vector<2x128xf32>
    %209 = arith.mulf %208, %32 : vector<2x128xf32>
    %210 = arith.addf %202, %209 : vector<2x128xf32>
    %c4_99 = arith.constant 4 : index
    %c3_100 = arith.constant 3 : index
    %211 = memref.load %arg3[%c4_99, %c3_100] : memref<8x4xf32, #tpu.memory_space<smem>>
    %212 = vector.broadcast %211 : f32 to vector<2x128xf32>
    %213 = arith.mulf %212, %34 : vector<2x128xf32>
    %214 = arith.addf %206, %213 : vector<2x128xf32>
    %c4_101 = arith.constant 4 : index
    %c3_102 = arith.constant 3 : index
    %215 = memref.load %arg4[%c4_101, %c3_102] : memref<8x4xf32, #tpu.memory_space<smem>>
    %216 = vector.broadcast %215 : f32 to vector<2x128xf32>
    %217 = arith.mulf %216, %34 : vector<2x128xf32>
    %218 = arith.addf %210, %217 : vector<2x128xf32>
    %219 = arith.mulf %214, %218 : vector<2x128xf32>
    %c5 = arith.constant 5 : index
    %220 = memref.load %arg6[%c5] : memref<8xf32, #tpu.memory_space<smem>>
    %c5_103 = arith.constant 5 : index
    %c0_104 = arith.constant 0 : index
    %221 = memref.load %arg3[%c5_103, %c0_104] : memref<8x4xf32, #tpu.memory_space<smem>>
    %222 = vector.broadcast %221 : f32 to vector<2x128xf32>
    %223 = arith.mulf %222, %28 : vector<2x128xf32>
    %224 = vector.broadcast %220 : f32 to vector<2x128xf32>
    %225 = arith.addf %224, %223 : vector<2x128xf32>
    %c5_105 = arith.constant 5 : index
    %226 = memref.load %arg7[%c5_105] : memref<8xf32, #tpu.memory_space<smem>>
    %c5_106 = arith.constant 5 : index
    %c0_107 = arith.constant 0 : index
    %227 = memref.load %arg4[%c5_106, %c0_107] : memref<8x4xf32, #tpu.memory_space<smem>>
    %228 = vector.broadcast %227 : f32 to vector<2x128xf32>
    %229 = arith.mulf %228, %28 : vector<2x128xf32>
    %230 = vector.broadcast %226 : f32 to vector<2x128xf32>
    %231 = arith.addf %230, %229 : vector<2x128xf32>
    %c5_108 = arith.constant 5 : index
    %c1_109 = arith.constant 1 : index
    %232 = memref.load %arg3[%c5_108, %c1_109] : memref<8x4xf32, #tpu.memory_space<smem>>
    %233 = vector.broadcast %232 : f32 to vector<2x128xf32>
    %234 = arith.mulf %233, %30 : vector<2x128xf32>
    %235 = arith.addf %225, %234 : vector<2x128xf32>
    %c5_110 = arith.constant 5 : index
    %c1_111 = arith.constant 1 : index
    %236 = memref.load %arg4[%c5_110, %c1_111] : memref<8x4xf32, #tpu.memory_space<smem>>
    %237 = vector.broadcast %236 : f32 to vector<2x128xf32>
    %238 = arith.mulf %237, %30 : vector<2x128xf32>
    %239 = arith.addf %231, %238 : vector<2x128xf32>
    %c5_112 = arith.constant 5 : index
    %c2_113 = arith.constant 2 : index
    %240 = memref.load %arg3[%c5_112, %c2_113] : memref<8x4xf32, #tpu.memory_space<smem>>
    %241 = vector.broadcast %240 : f32 to vector<2x128xf32>
    %242 = arith.mulf %241, %32 : vector<2x128xf32>
    %243 = arith.addf %235, %242 : vector<2x128xf32>
    %c5_114 = arith.constant 5 : index
    %c2_115 = arith.constant 2 : index
    %244 = memref.load %arg4[%c5_114, %c2_115] : memref<8x4xf32, #tpu.memory_space<smem>>
    %245 = vector.broadcast %244 : f32 to vector<2x128xf32>
    %246 = arith.mulf %245, %32 : vector<2x128xf32>
    %247 = arith.addf %239, %246 : vector<2x128xf32>
    %c5_116 = arith.constant 5 : index
    %c3_117 = arith.constant 3 : index
    %248 = memref.load %arg3[%c5_116, %c3_117] : memref<8x4xf32, #tpu.memory_space<smem>>
    %249 = vector.broadcast %248 : f32 to vector<2x128xf32>
    %250 = arith.mulf %249, %34 : vector<2x128xf32>
    %251 = arith.addf %243, %250 : vector<2x128xf32>
    %c5_118 = arith.constant 5 : index
    %c3_119 = arith.constant 3 : index
    %252 = memref.load %arg4[%c5_118, %c3_119] : memref<8x4xf32, #tpu.memory_space<smem>>
    %253 = vector.broadcast %252 : f32 to vector<2x128xf32>
    %254 = arith.mulf %253, %34 : vector<2x128xf32>
    %255 = arith.addf %247, %254 : vector<2x128xf32>
    %256 = arith.mulf %251, %255 : vector<2x128xf32>
    %c6 = arith.constant 6 : index
    %257 = memref.load %arg6[%c6] : memref<8xf32, #tpu.memory_space<smem>>
    %c6_120 = arith.constant 6 : index
    %c0_121 = arith.constant 0 : index
    %258 = memref.load %arg3[%c6_120, %c0_121] : memref<8x4xf32, #tpu.memory_space<smem>>
    %259 = vector.broadcast %258 : f32 to vector<2x128xf32>
    %260 = arith.mulf %259, %28 : vector<2x128xf32>
    %261 = vector.broadcast %257 : f32 to vector<2x128xf32>
    %262 = arith.addf %261, %260 : vector<2x128xf32>
    %c6_122 = arith.constant 6 : index
    %263 = memref.load %arg7[%c6_122] : memref<8xf32, #tpu.memory_space<smem>>
    %c6_123 = arith.constant 6 : index
    %c0_124 = arith.constant 0 : index
    %264 = memref.load %arg4[%c6_123, %c0_124] : memref<8x4xf32, #tpu.memory_space<smem>>
    %265 = vector.broadcast %264 : f32 to vector<2x128xf32>
    %266 = arith.mulf %265, %28 : vector<2x128xf32>
    %267 = vector.broadcast %263 : f32 to vector<2x128xf32>
    %268 = arith.addf %267, %266 : vector<2x128xf32>
    %c6_125 = arith.constant 6 : index
    %c1_126 = arith.constant 1 : index
    %269 = memref.load %arg3[%c6_125, %c1_126] : memref<8x4xf32, #tpu.memory_space<smem>>
    %270 = vector.broadcast %269 : f32 to vector<2x128xf32>
    %271 = arith.mulf %270, %30 : vector<2x128xf32>
    %272 = arith.addf %262, %271 : vector<2x128xf32>
    %c6_127 = arith.constant 6 : index
    %c1_128 = arith.constant 1 : index
    %273 = memref.load %arg4[%c6_127, %c1_128] : memref<8x4xf32, #tpu.memory_space<smem>>
    %274 = vector.broadcast %273 : f32 to vector<2x128xf32>
    %275 = arith.mulf %274, %30 : vector<2x128xf32>
    %276 = arith.addf %268, %275 : vector<2x128xf32>
    %c6_129 = arith.constant 6 : index
    %c2_130 = arith.constant 2 : index
    %277 = memref.load %arg3[%c6_129, %c2_130] : memref<8x4xf32, #tpu.memory_space<smem>>
    %278 = vector.broadcast %277 : f32 to vector<2x128xf32>
    %279 = arith.mulf %278, %32 : vector<2x128xf32>
    %280 = arith.addf %272, %279 : vector<2x128xf32>
    %c6_131 = arith.constant 6 : index
    %c2_132 = arith.constant 2 : index
    %281 = memref.load %arg4[%c6_131, %c2_132] : memref<8x4xf32, #tpu.memory_space<smem>>
    %282 = vector.broadcast %281 : f32 to vector<2x128xf32>
    %283 = arith.mulf %282, %32 : vector<2x128xf32>
    %284 = arith.addf %276, %283 : vector<2x128xf32>
    %c6_133 = arith.constant 6 : index
    %c3_134 = arith.constant 3 : index
    %285 = memref.load %arg3[%c6_133, %c3_134] : memref<8x4xf32, #tpu.memory_space<smem>>
    %286 = vector.broadcast %285 : f32 to vector<2x128xf32>
    %287 = arith.mulf %286, %34 : vector<2x128xf32>
    %288 = arith.addf %280, %287 : vector<2x128xf32>
    %c6_135 = arith.constant 6 : index
    %c3_136 = arith.constant 3 : index
    %289 = memref.load %arg4[%c6_135, %c3_136] : memref<8x4xf32, #tpu.memory_space<smem>>
    %290 = vector.broadcast %289 : f32 to vector<2x128xf32>
    %291 = arith.mulf %290, %34 : vector<2x128xf32>
    %292 = arith.addf %284, %291 : vector<2x128xf32>
    %293 = arith.mulf %288, %292 : vector<2x128xf32>
    %c7 = arith.constant 7 : index
    %294 = memref.load %arg6[%c7] : memref<8xf32, #tpu.memory_space<smem>>
    %c7_137 = arith.constant 7 : index
    %c0_138 = arith.constant 0 : index
    %295 = memref.load %arg3[%c7_137, %c0_138] : memref<8x4xf32, #tpu.memory_space<smem>>
    %296 = vector.broadcast %295 : f32 to vector<2x128xf32>
    %297 = arith.mulf %296, %28 : vector<2x128xf32>
    %298 = vector.broadcast %294 : f32 to vector<2x128xf32>
    %299 = arith.addf %298, %297 : vector<2x128xf32>
    %c7_139 = arith.constant 7 : index
    %300 = memref.load %arg7[%c7_139] : memref<8xf32, #tpu.memory_space<smem>>
    %c7_140 = arith.constant 7 : index
    %c0_141 = arith.constant 0 : index
    %301 = memref.load %arg4[%c7_140, %c0_141] : memref<8x4xf32, #tpu.memory_space<smem>>
    %302 = vector.broadcast %301 : f32 to vector<2x128xf32>
    %303 = arith.mulf %302, %28 : vector<2x128xf32>
    %304 = vector.broadcast %300 : f32 to vector<2x128xf32>
    %305 = arith.addf %304, %303 : vector<2x128xf32>
    %c7_142 = arith.constant 7 : index
    %c1_143 = arith.constant 1 : index
    %306 = memref.load %arg3[%c7_142, %c1_143] : memref<8x4xf32, #tpu.memory_space<smem>>
    %307 = vector.broadcast %306 : f32 to vector<2x128xf32>
    %308 = arith.mulf %307, %30 : vector<2x128xf32>
    %309 = arith.addf %299, %308 : vector<2x128xf32>
    %c7_144 = arith.constant 7 : index
    %c1_145 = arith.constant 1 : index
    %310 = memref.load %arg4[%c7_144, %c1_145] : memref<8x4xf32, #tpu.memory_space<smem>>
    %311 = vector.broadcast %310 : f32 to vector<2x128xf32>
    %312 = arith.mulf %311, %30 : vector<2x128xf32>
    %313 = arith.addf %305, %312 : vector<2x128xf32>
    %c7_146 = arith.constant 7 : index
    %c2_147 = arith.constant 2 : index
    %314 = memref.load %arg3[%c7_146, %c2_147] : memref<8x4xf32, #tpu.memory_space<smem>>
    %315 = vector.broadcast %314 : f32 to vector<2x128xf32>
    %316 = arith.mulf %315, %32 : vector<2x128xf32>
    %317 = arith.addf %309, %316 : vector<2x128xf32>
    %c7_148 = arith.constant 7 : index
    %c2_149 = arith.constant 2 : index
    %318 = memref.load %arg4[%c7_148, %c2_149] : memref<8x4xf32, #tpu.memory_space<smem>>
    %319 = vector.broadcast %318 : f32 to vector<2x128xf32>
    %320 = arith.mulf %319, %32 : vector<2x128xf32>
    %321 = arith.addf %313, %320 : vector<2x128xf32>
    %c7_150 = arith.constant 7 : index
    %c3_151 = arith.constant 3 : index
    %322 = memref.load %arg3[%c7_150, %c3_151] : memref<8x4xf32, #tpu.memory_space<smem>>
    %323 = vector.broadcast %322 : f32 to vector<2x128xf32>
    %324 = arith.mulf %323, %34 : vector<2x128xf32>
    %325 = arith.addf %317, %324 : vector<2x128xf32>
    %c7_152 = arith.constant 7 : index
    %c3_153 = arith.constant 3 : index
    %326 = memref.load %arg4[%c7_152, %c3_153] : memref<8x4xf32, #tpu.memory_space<smem>>
    %327 = vector.broadcast %326 : f32 to vector<2x128xf32>
    %328 = arith.mulf %327, %34 : vector<2x128xf32>
    %329 = arith.addf %321, %328 : vector<2x128xf32>
    %330 = arith.mulf %325, %329 : vector<2x128xf32>
    %c0_154 = arith.constant 0 : index
    %c0_155 = arith.constant 0 : index
    %331 = memref.load %arg5[%c0_154, %c0_155] : memref<4x8xf32, #tpu.memory_space<smem>>
    %332 = vector.broadcast %331 : f32 to vector<2x128xf32>
    %333 = arith.mulf %332, %71 : vector<2x128xf32>
    %c0_156 = arith.constant 0 : index
    %c1_157 = arith.constant 1 : index
    %334 = memref.load %arg5[%c0_156, %c1_157] : memref<4x8xf32, #tpu.memory_space<smem>>
    %335 = vector.broadcast %334 : f32 to vector<2x128xf32>
    %336 = arith.mulf %335, %108 : vector<2x128xf32>
    %337 = arith.addf %333, %336 : vector<2x128xf32>
    %c0_158 = arith.constant 0 : index
    %c2_159 = arith.constant 2 : index
    %338 = memref.load %arg5[%c0_158, %c2_159] : memref<4x8xf32, #tpu.memory_space<smem>>
    %339 = vector.broadcast %338 : f32 to vector<2x128xf32>
    %340 = arith.mulf %339, %145 : vector<2x128xf32>
    %341 = arith.addf %337, %340 : vector<2x128xf32>
    %c0_160 = arith.constant 0 : index
    %c3_161 = arith.constant 3 : index
    %342 = memref.load %arg5[%c0_160, %c3_161] : memref<4x8xf32, #tpu.memory_space<smem>>
    %343 = vector.broadcast %342 : f32 to vector<2x128xf32>
    %344 = arith.mulf %343, %182 : vector<2x128xf32>
    %345 = arith.addf %341, %344 : vector<2x128xf32>
    %c0_162 = arith.constant 0 : index
    %c4_163 = arith.constant 4 : index
    %346 = memref.load %arg5[%c0_162, %c4_163] : memref<4x8xf32, #tpu.memory_space<smem>>
    %347 = vector.broadcast %346 : f32 to vector<2x128xf32>
    %348 = arith.mulf %347, %219 : vector<2x128xf32>
    %349 = arith.addf %345, %348 : vector<2x128xf32>
    %c0_164 = arith.constant 0 : index
    %c5_165 = arith.constant 5 : index
    %350 = memref.load %arg5[%c0_164, %c5_165] : memref<4x8xf32, #tpu.memory_space<smem>>
    %351 = vector.broadcast %350 : f32 to vector<2x128xf32>
    %352 = arith.mulf %351, %256 : vector<2x128xf32>
    %353 = arith.addf %349, %352 : vector<2x128xf32>
    %c0_166 = arith.constant 0 : index
    %c6_167 = arith.constant 6 : index
    %354 = memref.load %arg5[%c0_166, %c6_167] : memref<4x8xf32, #tpu.memory_space<smem>>
    %355 = vector.broadcast %354 : f32 to vector<2x128xf32>
    %356 = arith.mulf %355, %293 : vector<2x128xf32>
    %357 = arith.addf %353, %356 : vector<2x128xf32>
    %c0_168 = arith.constant 0 : index
    %c7_169 = arith.constant 7 : index
    %358 = memref.load %arg5[%c0_168, %c7_169] : memref<4x8xf32, #tpu.memory_space<smem>>
    %359 = vector.broadcast %358 : f32 to vector<2x128xf32>
    %360 = arith.mulf %359, %330 : vector<2x128xf32>
    %361 = arith.addf %357, %360 : vector<2x128xf32>
    %362 = arith.addf %1, %361 : vector<2x128xf32>
    %c0_170 = arith.constant 0 : index
    %c0_171 = arith.constant 0 : index
    %c0_172 = arith.constant 0 : index
    %c0_173 = arith.constant 0 : index
    %363 = vector.load %arg8[%c0_170, %c0_171, %c0_172, %c0_173] : memref<1x4x2x128xf32, #tpu.memory_space<vmem>>, vector<1x1x2x128xf32>
    %364 = vector.shape_cast %363 : vector<1x1x2x128xf32> to vector<2x128xf32>
    %365 = vector.shape_cast %362 : vector<2x128xf32> to vector<1x1x2x128xf32>
    tpu.vector_store %arg8[%c0_170, %c0_171, %c0_172, %c0_173], %365 {strides = array<i32>} : memref<1x4x2x128xf32, #tpu.memory_space<vmem>>, vector<1x1x2x128xf32>,
    %c1_174 = arith.constant 1 : index
    %c0_175 = arith.constant 0 : index
    %366 = memref.load %arg5[%c1_174, %c0_175] : memref<4x8xf32, #tpu.memory_space<smem>>
    %367 = vector.broadcast %366 : f32 to vector<2x128xf32>
    %368 = arith.mulf %367, %71 : vector<2x128xf32>
    %c1_176 = arith.constant 1 : index
    %c1_177 = arith.constant 1 : index
    %369 = memref.load %arg5[%c1_176, %c1_177] : memref<4x8xf32, #tpu.memory_space<smem>>
    %370 = vector.broadcast %369 : f32 to vector<2x128xf32>
    %371 = arith.mulf %370, %108 : vector<2x128xf32>
    %372 = arith.addf %368, %371 : vector<2x128xf32>
    %c1_178 = arith.constant 1 : index
    %c2_179 = arith.constant 2 : index
    %373 = memref.load %arg5[%c1_178, %c2_179] : memref<4x8xf32, #tpu.memory_space<smem>>
    %374 = vector.broadcast %373 : f32 to vector<2x128xf32>
    %375 = arith.mulf %374, %145 : vector<2x128xf32>
    %376 = arith.addf %372, %375 : vector<2x128xf32>
    %c1_180 = arith.constant 1 : index
    %c3_181 = arith.constant 3 : index
    %377 = memref.load %arg5[%c1_180, %c3_181] : memref<4x8xf32, #tpu.memory_space<smem>>
    %378 = vector.broadcast %377 : f32 to vector<2x128xf32>
    %379 = arith.mulf %378, %182 : vector<2x128xf32>
    %380 = arith.addf %376, %379 : vector<2x128xf32>
    %c1_182 = arith.constant 1 : index
    %c4_183 = arith.constant 4 : index
    %381 = memref.load %arg5[%c1_182, %c4_183] : memref<4x8xf32, #tpu.memory_space<smem>>
    %382 = vector.broadcast %381 : f32 to vector<2x128xf32>
    %383 = arith.mulf %382, %219 : vector<2x128xf32>
    %384 = arith.addf %380, %383 : vector<2x128xf32>
    %c1_184 = arith.constant 1 : index
    %c5_185 = arith.constant 5 : index
    %385 = memref.load %arg5[%c1_184, %c5_185] : memref<4x8xf32, #tpu.memory_space<smem>>
    %386 = vector.broadcast %385 : f32 to vector<2x128xf32>
    %387 = arith.mulf %386, %256 : vector<2x128xf32>
    %388 = arith.addf %384, %387 : vector<2x128xf32>
    %c1_186 = arith.constant 1 : index
    %c6_187 = arith.constant 6 : index
    %389 = memref.load %arg5[%c1_186, %c6_187] : memref<4x8xf32, #tpu.memory_space<smem>>
    %390 = vector.broadcast %389 : f32 to vector<2x128xf32>
    %391 = arith.mulf %390, %293 : vector<2x128xf32>
    %392 = arith.addf %388, %391 : vector<2x128xf32>
    %c1_188 = arith.constant 1 : index
    %c7_189 = arith.constant 7 : index
    %393 = memref.load %arg5[%c1_188, %c7_189] : memref<4x8xf32, #tpu.memory_space<smem>>
    %394 = vector.broadcast %393 : f32 to vector<2x128xf32>
    %395 = arith.mulf %394, %330 : vector<2x128xf32>
    %396 = arith.addf %392, %395 : vector<2x128xf32>
    %397 = arith.addf %3, %396 : vector<2x128xf32>
    %c0_190 = arith.constant 0 : index
    %c1_191 = arith.constant 1 : index
    %c0_192 = arith.constant 0 : index
    %c0_193 = arith.constant 0 : index
    %398 = vector.load %arg8[%c0_190, %c1_191, %c0_192, %c0_193] : memref<1x4x2x128xf32, #tpu.memory_space<vmem>>, vector<1x1x2x128xf32>
    %399 = vector.shape_cast %398 : vector<1x1x2x128xf32> to vector<2x128xf32>
    %400 = vector.shape_cast %397 : vector<2x128xf32> to vector<1x1x2x128xf32>
    tpu.vector_store %arg8[%c0_190, %c1_191, %c0_192, %c0_193], %400 {strides = array<i32>} : memref<1x4x2x128xf32, #tpu.memory_space<vmem>>, vector<1x1x2x128xf32>,
    %c2_194 = arith.constant 2 : index
    %c0_195 = arith.constant 0 : index
    %401 = memref.load %arg5[%c2_194, %c0_195] : memref<4x8xf32, #tpu.memory_space<smem>>
    %402 = vector.broadcast %401 : f32 to vector<2x128xf32>
    %403 = arith.mulf %402, %71 : vector<2x128xf32>
    %c2_196 = arith.constant 2 : index
    %c1_197 = arith.constant 1 : index
    %404 = memref.load %arg5[%c2_196, %c1_197] : memref<4x8xf32, #tpu.memory_space<smem>>
    %405 = vector.broadcast %404 : f32 to vector<2x128xf32>
    %406 = arith.mulf %405, %108 : vector<2x128xf32>
    %407 = arith.addf %403, %406 : vector<2x128xf32>
    %c2_198 = arith.constant 2 : index
    %c2_199 = arith.constant 2 : index
    %408 = memref.load %arg5[%c2_198, %c2_199] : memref<4x8xf32, #tpu.memory_space<smem>>
    %409 = vector.broadcast %408 : f32 to vector<2x128xf32>
    %410 = arith.mulf %409, %145 : vector<2x128xf32>
    %411 = arith.addf %407, %410 : vector<2x128xf32>
    %c2_200 = arith.constant 2 : index
    %c3_201 = arith.constant 3 : index
    %412 = memref.load %arg5[%c2_200, %c3_201] : memref<4x8xf32, #tpu.memory_space<smem>>
    %413 = vector.broadcast %412 : f32 to vector<2x128xf32>
    %414 = arith.mulf %413, %182 : vector<2x128xf32>
    %415 = arith.addf %411, %414 : vector<2x128xf32>
    %c2_202 = arith.constant 2 : index
    %c4_203 = arith.constant 4 : index
    %416 = memref.load %arg5[%c2_202, %c4_203] : memref<4x8xf32, #tpu.memory_space<smem>>
    %417 = vector.broadcast %416 : f32 to vector<2x128xf32>
    %418 = arith.mulf %417, %219 : vector<2x128xf32>
    %419 = arith.addf %415, %418 : vector<2x128xf32>
    %c2_204 = arith.constant 2 : index
    %c5_205 = arith.constant 5 : index
    %420 = memref.load %arg5[%c2_204, %c5_205] : memref<4x8xf32, #tpu.memory_space<smem>>
    %421 = vector.broadcast %420 : f32 to vector<2x128xf32>
    %422 = arith.mulf %421, %256 : vector<2x128xf32>
    %423 = arith.addf %419, %422 : vector<2x128xf32>
    %c2_206 = arith.constant 2 : index
    %c6_207 = arith.constant 6 : index
    %424 = memref.load %arg5[%c2_206, %c6_207] : memref<4x8xf32, #tpu.memory_space<smem>>
    %425 = vector.broadcast %424 : f32 to vector<2x128xf32>
    %426 = arith.mulf %425, %293 : vector<2x128xf32>
    %427 = arith.addf %423, %426 : vector<2x128xf32>
    %c2_208 = arith.constant 2 : index
    %c7_209 = arith.constant 7 : index
    %428 = memref.load %arg5[%c2_208, %c7_209] : memref<4x8xf32, #tpu.memory_space<smem>>
    %429 = vector.broadcast %428 : f32 to vector<2x128xf32>
    %430 = arith.mulf %429, %330 : vector<2x128xf32>
    %431 = arith.addf %427, %430 : vector<2x128xf32>
    %432 = arith.addf %5, %431 : vector<2x128xf32>
    %c0_210 = arith.constant 0 : index
    %c2_211 = arith.constant 2 : index
    %c0_212 = arith.constant 0 : index
    %c0_213 = arith.constant 0 : index
    %433 = vector.load %arg8[%c0_210, %c2_211, %c0_212, %c0_213] : memref<1x4x2x128xf32, #tpu.memory_space<vmem>>, vector<1x1x2x128xf32>
    %434 = vector.shape_cast %433 : vector<1x1x2x128xf32> to vector<2x128xf32>
    %435 = vector.shape_cast %432 : vector<2x128xf32> to vector<1x1x2x128xf32>
    tpu.vector_store %arg8[%c0_210, %c2_211, %c0_212, %c0_213], %435 {strides = array<i32>} : memref<1x4x2x128xf32, #tpu.memory_space<vmem>>, vector<1x1x2x128xf32>,
    %c3_214 = arith.constant 3 : index
    %c0_215 = arith.constant 0 : index
    %436 = memref.load %arg5[%c3_214, %c0_215] : memref<4x8xf32, #tpu.memory_space<smem>>
    %437 = vector.broadcast %436 : f32 to vector<2x128xf32>
    %438 = arith.mulf %437, %71 : vector<2x128xf32>
    %c3_216 = arith.constant 3 : index
    %c1_217 = arith.constant 1 : index
    %439 = memref.load %arg5[%c3_216, %c1_217] : memref<4x8xf32, #tpu.memory_space<smem>>
    %440 = vector.broadcast %439 : f32 to vector<2x128xf32>
    %441 = arith.mulf %440, %108 : vector<2x128xf32>
    %442 = arith.addf %438, %441 : vector<2x128xf32>
    %c3_218 = arith.constant 3 : index
    %c2_219 = arith.constant 2 : index
    %443 = memref.load %arg5[%c3_218, %c2_219] : memref<4x8xf32, #tpu.memory_space<smem>>
    %444 = vector.broadcast %443 : f32 to vector<2x128xf32>
    %445 = arith.mulf %444, %145 : vector<2x128xf32>
    %446 = arith.addf %442, %445 : vector<2x128xf32>
    %c3_220 = arith.constant 3 : index
    %c3_221 = arith.constant 3 : index
    %447 = memref.load %arg5[%c3_220, %c3_221] : memref<4x8xf32, #tpu.memory_space<smem>>
    %448 = vector.broadcast %447 : f32 to vector<2x128xf32>
    %449 = arith.mulf %448, %182 : vector<2x128xf32>
    %450 = arith.addf %446, %449 : vector<2x128xf32>
    %c3_222 = arith.constant 3 : index
    %c4_223 = arith.constant 4 : index
    %451 = memref.load %arg5[%c3_222, %c4_223] : memref<4x8xf32, #tpu.memory_space<smem>>
    %452 = vector.broadcast %451 : f32 to vector<2x128xf32>
    %453 = arith.mulf %452, %219 : vector<2x128xf32>
    %454 = arith.addf %450, %453 : vector<2x128xf32>
    %c3_224 = arith.constant 3 : index
    %c5_225 = arith.constant 5 : index
    %455 = memref.load %arg5[%c3_224, %c5_225] : memref<4x8xf32, #tpu.memory_space<smem>>
    %456 = vector.broadcast %455 : f32 to vector<2x128xf32>
    %457 = arith.mulf %456, %256 : vector<2x128xf32>
    %458 = arith.addf %454, %457 : vector<2x128xf32>
    %c3_226 = arith.constant 3 : index
    %c6_227 = arith.constant 6 : index
    %459 = memref.load %arg5[%c3_226, %c6_227] : memref<4x8xf32, #tpu.memory_space<smem>>
    %460 = vector.broadcast %459 : f32 to vector<2x128xf32>
    %461 = arith.mulf %460, %293 : vector<2x128xf32>
    %462 = arith.addf %458, %461 : vector<2x128xf32>
    %c3_228 = arith.constant 3 : index
    %c7_229 = arith.constant 7 : index
    %463 = memref.load %arg5[%c3_228, %c7_229] : memref<4x8xf32, #tpu.memory_space<smem>>
    %464 = vector.broadcast %463 : f32 to vector<2x128xf32>
    %465 = arith.mulf %464, %330 : vector<2x128xf32>
    %466 = arith.addf %462, %465 : vector<2x128xf32>
    %467 = arith.addf %7, %466 : vector<2x128xf32>
    %c0_230 = arith.constant 0 : index
    %c3_231 = arith.constant 3 : index
    %c0_232 = arith.constant 0 : index
    %c0_233 = arith.constant 0 : index
    %468 = vector.load %arg8[%c0_230, %c3_231, %c0_232, %c0_233] : memref<1x4x2x128xf32, #tpu.memory_space<vmem>>, vector<1x1x2x128xf32>
    %469 = vector.shape_cast %468 : vector<1x1x2x128xf32> to vector<2x128xf32>
    %470 = vector.shape_cast %467 : vector<2x128xf32> to vector<1x1x2x128xf32>
    tpu.vector_store %arg8[%c0_230, %c3_231, %c0_232, %c0_233], %470 {strides = array<i32>} : memref<1x4x2x128xf32, #tpu.memory_space<vmem>>, vector<1x1x2x128xf32>,
    return
  }
  func.func @transform_0(%arg0: i32, %arg1: i32) -> (i32, i32, i32, i32) {
    %c0_i32 = arith.constant 0 : i32
    %c0_i32_0 = arith.constant 0 : i32
    %c0_i32_1 = arith.constant 0 : i32
    return %arg0, %c0_i32, %arg1, %c0_i32_0 : i32, i32, i32, i32
  }
  func.func @transform_1(%arg0: i32, %arg1: i32) -> (i32, i32) {
    %c0_i32 = arith.constant 0 : i32
    %c0_i32_0 = arith.constant 0 : i32
    %c0_i32_1 = arith.constant 0 : i32
    return %c0_i32, %c0_i32_0 : i32, i32
  }
  func.func @transform_2(%arg0: i32, %arg1: i32) -> (i32, i32) {
    %c0_i32 = arith.constant 0 : i32
    %c0_i32_0 = arith.constant 0 : i32
    %c0_i32_1 = arith.constant 0 : i32
    return %c0_i32, %c0_i32_0 : i32, i32
  }
  func.func @transform_3(%arg0: i32, %arg1: i32) -> (i32, i32) {
    %c0_i32 = arith.constant 0 : i32
    %c0_i32_0 = arith.constant 0 : i32
    %c0_i32_1 = arith.constant 0 : i32
    return %c0_i32, %c0_i32_0 : i32, i32
  }
  func.func @transform_4(%arg0: i32, %arg1: i32) -> i32 {
    %c0_i32 = arith.constant 0 : i32
    %c0_i32_0 = arith.constant 0 : i32
    return %c0_i32 : i32
  }
  func.func @transform_5(%arg0: i32, %arg1: i32) -> i32 {
    %c0_i32 = arith.constant 0 : i32
    %c0_i32_0 = arith.constant 0 : i32
    return %c0_i32 : i32
  }
  func.func @transform_6(%arg0: i32, %arg1: i32) -> (i32, i32, i32, i32) {
    %c0_i32 = arith.constant 0 : i32
    %c0_i32_0 = arith.constant 0 : i32
    %c0_i32_1 = arith.constant 0 : i32
    return %arg0, %c0_i32, %arg1, %c0_i32_0 : i32, i32, i32, i32
  }
}

</mosaic_0001>

<llo_original>
// kernel: gn_forward.1
$region0: #{gn_forward.1}
  #allocation0 [shape = 'u32[]', space=smem, size = 0x4, offset = 0x4, fixed_abs, tag = 'smem constant byte address 0x4 - core index']
  #allocation1 [shape = 'u32[144,128]{1,0:T(1,128)}', space=vmem, size = 0x12000, scoped, tag = 'internal scratch']
  %s0 = inlined_call_operand.vmem [shape: f32[2,4,2,128], index: 0, kind: input, shape index: {}]
  %s1 = inlined_call_operand.vmem [shape: f32[8,4], index: 1, kind: input, shape index: {}]
  %s2 = inlined_call_operand.vmem [shape: f32[8,4], index: 2, kind: input, shape index: {}]
  %s3 = inlined_call_operand.vmem [shape: f32[4,8], index: 3, kind: input, shape index: {}]
  %s4 = inlined_call_operand.vmem [shape: f32[8], index: 4, kind: input, shape index: {}]
  %s5 = inlined_call_operand.vmem [shape: f32[8], index: 5, kind: input, shape index: {}]
  %s6 = inlined_call_operand.vmem [shape: f32[2,4,2,128], index: 6, kind: output, shape index: {}]
  %s7 = sld [smem:[#allocation0]]
  $region77: #{gn_forward.1} parent=0
    _
  %s9 = ssub.s32 1, %s7
  %s10 = scalar_select 0, %s9, %s7
  $region1: #{gn_forward.1} parent=0
    #allocation2 [shape = 'u8[4096]{0}', space=smem, size = 0x1000, scoped, tag = 'input window, operand 1, single buffered']
    #allocation3 [shape = 's32[2]{0}', space=sflag, size = 0x8, scoped, tag = 'scoped memory for gn_forward.1']
    #allocation4 [shape = 'u8[4096]{0}', space=smem, size = 0x1000, scoped, tag = 'input window, operand 2, single buffered']
    #allocation5 [shape = 's32[1]{0}', space=sflag, size = 0x4, scoped, tag = 'scoped memory for gn_forward.1']
    #allocation6 [shape = 'u8[2048]{0}', space=smem, size = 0x800, scoped, tag = 'input window, operand 3, single buffered']
    #allocation7 [shape = 'u8[512]{0}', space=smem, size = 0x200, scoped, tag = 'input window, operand 4, single buffered']
    #allocation8 [shape = 's32[1]{0}', space=sflag, size = 0x4, scoped, tag = 'scoped memory for gn_forward.1']
    #allocation9 [shape = 'u8[512]{0}', space=smem, size = 0x200, scoped, tag = 'input window, operand 5, single buffered']
    %11 = vsyncpa [#allocation3], 0
    %12 = vsyncpa [#allocation5], 0
    %13 = vsyncpa [#allocation8], 0
    loop: start=0, step=1, limit=4
    $region2: #{gn_forward.1} parent=1 // loop_pre_header
      _
    $region3: #{gn_forward.1} parent=1 // loop_header
      %s15 = sphi 0, %s19
      %p16 = scmp.ge.s32.totalorder %s15, 4
      %s22 = sphi 0, %s34
      %s23 = sphi 0, %s30
      %s24 = sphi 0, %s22
      %s25 = sphi 0, %s23
      %s26 = sphi 0, %s24
      %s27 = sphi 0, %s25
      %s39 = sphi 0, %s41
      %s42 = sphi 0, %s39
      %s43 = sphi 0, %s42
      %s59 = sphi 0, %s43
      %s63 = sphi 0, %s63
      %s65 = sphi 0, %s63
      %s66 = sphi 0, %s65
      %s80 = sphi 0, %s66
      %s84 = sphi 0, %s84
      %s86 = sphi 0, %s84
      %s87 = sphi 0, %s86
      %s101 = sphi 0, %s87
      %s105 = sphi 0, %s105
      %s107 = sphi 0, %s105
      %s108 = sphi 0, %s107
      %s122 = sphi 0, %s108
      %s126 = sphi 0, %s126
      %s128 = sphi 0, %s126
      %s129 = sphi 0, %s128
      %s143 = sphi 0, %s129
      %s147 = sphi 0, %s147
      %s149 = sphi 0, %s147
      %s150 = sphi 0, %s149
      %s164 = sphi 0, %s150
      %s172 = sphi 0, %s174
      %s175 = sphi 0, %s172
      %s176 = sphi 0, %s175
      %s192 = sphi 0, %s176
    $region4: #{gn_forward.1} parent=1 // loop_header_branch
      %18 = sbr.rel (%p16) target = $region8
    $region5: #{gn_forward.1} parent=1 // loop_body
      %s20 = ssub.s32 %s15, 1
      %s21 = ssub.s32 %s15, 2
      %s28 = sadd.s32 1, %s23
      %p29 = scmp.ge.s32.totalorder %s28, 1
      %s30 = scalar_select %p29, 0, %s28
      %s31 = sadd.s32 1, %s22
      %s32 = scalar_select %p29, %s31, %s22
      %p33 = scmp.ge.s32.totalorder %s32, 2
      %s34 = scalar_select %p33, 0, %s32
      %s35 = ssub.s32 %s22, %s34
      %s36 = ssub.s32 %s23, %s30
      %s37 = sor.u32 %s35, %s36
      %p38 = scmp.eq.s32.totalorder %s37, 0
      %s40 = sadd.s32 %s39, 1
      %s41 = scalar_select %p38, %s39, %s40
      %p44 = pneg %p38
      %p45 = scmp.eq.s32.totalorder %s15, 1
      %p46 = por %p44, %p45
      %p47 = scmp.ne.s32.totalorder %s39, %s42
      %p48 = scmp.eq.s32.totalorder %s15, 0
      %p49 = por %p47, %p48
      %p50 = scmp.ne.s32.totalorder %s39, %s42
      %p51 = scmp.eq.s32.totalorder %s20, 1
      %p52 = por %p50, %p51
      %p53 = scmp.ne.s32.totalorder %s42, %s43
      %p54 = scmp.eq.s32.totalorder %s20, 0
      %p55 = por %p53, %p54
      %p56 = scmp.ne.s32.totalorder %s42, %s43
      %p57 = scmp.eq.s32.totalorder %s21, 1
      %p58 = por %p56, %p57
      %p60 = scmp.ne.s32.totalorder %s43, %s59
      %p61 = scmp.eq.s32.totalorder %s21, 0
      %p62 = por %p60, %p61
      %s64 = sadd.s32 %s63, 1
      %p67 = scmp.eq.s32.totalorder %s15, 1
      %p68 = scmp.ne.s32.totalorder %s63, %s65
      %p69 = scmp.eq.s32.totalorder %s15, 0
      %p70 = por %p68, %p69
      %p71 = scmp.ne.s32.totalorder %s63, %s65
      %p72 = scmp.eq.s32.totalorder %s20, 1
      %p73 = por %p71, %p72
      %p74 = scmp.ne.s32.totalorder %s65, %s66
      %p75 = scmp.eq.s32.totalorder %s20, 0
      %p76 = por %p74, %p75
      %p77 = scmp.ne.s32.totalorder %s65, %s66
      %p78 = scmp.eq.s32.totalorder %s21, 1
      %p79 = por %p77, %p78
      %p81 = scmp.ne.s32.totalorder %s66, %s80
      %p82 = scmp.eq.s32.totalorder %s21, 0
      %p83 = por %p81, %p82
      %s85 = sadd.s32 %s84, 1
      %p88 = scmp.eq.s32.totalorder %s15, 1
      %p89 = scmp.ne.s32.totalorder %s84, %s86
      %p90 = scmp.eq.s32.totalorder %s15, 0
      %p91 = por %p89, %p90
      %p92 = scmp.ne.s32.totalorder %s84, %s86
      %p93 = scmp.eq.s32.totalorder %s20, 1
      %p94 = por %p92, %p93
      %p95 = scmp.ne.s32.totalorder %s86, %s87
      %p96 = scmp.eq.s32.totalorder %s20, 0
      %p97 = por %p95, %p96
      %p98 = scmp.ne.s32.totalorder %s86, %s87
      %p99 = scmp.eq.s32.totalorder %s21, 1
      %p100 = por %p98, %p99
      %p102 = scmp.ne.s32.totalorder %s87, %s101
      %p103 = scmp.eq.s32.totalorder %s21, 0
      %p104 = por %p102, %p103
      %s106 = sadd.s32 %s105, 1
      %p109 = scmp.eq.s32.totalorder %s15, 1
      %p110 = scmp.ne.s32.totalorder %s105, %s107
      %p111 = scmp.eq.s32.totalorder %s15, 0
      %p112 = por %p110, %p111
      %p113 = scmp.ne.s32.totalorder %s105, %s107
      %p114 = scmp.eq.s32.totalorder %s20, 1
      %p115 = por %p113, %p114
      %p116 = scmp.ne.s32.totalorder %s107, %s108
      %p117 = scmp.eq.s32.totalorder %s20, 0
      %p118 = por %p116, %p117
      %p119 = scmp.ne.s32.totalorder %s107, %s108
      %p120 = scmp.eq.s32.totalorder %s21, 1
      %p121 = por %p119, %p120
      %p123 = scmp.ne.s32.totalorder %s108, %s122
      %p124 = scmp.eq.s32.totalorder %s21, 0
      %p125 = por %p123, %p124
      %s127 = sadd.s32 %s126, 1
      %p130 = scmp.eq.s32.totalorder %s15, 1
      %p131 = scmp.ne.s32.totalorder %s126, %s128
      %p132 = scmp.eq.s32.totalorder %s15, 0
      %p133 = por %p131, %p132
      %p134 = scmp.ne.s32.totalorder %s126, %s128
      %p135 = scmp.eq.s32.totalorder %s20, 1
      %p136 = por %p134, %p135
      %p137 = scmp.ne.s32.totalorder %s128, %s129
      %p138 = scmp.eq.s32.totalorder %s20, 0
      %p139 = por %p137, %p138
      %p140 = scmp.ne.s32.totalorder %s128, %s129
      %p141 = scmp.eq.s32.totalorder %s21, 1
      %p142 = por %p140, %p141
      %p144 = scmp.ne.s32.totalorder %s129, %s143
      %p145 = scmp.eq.s32.totalorder %s21, 0
      %p146 = por %p144, %p145
      %s148 = sadd.s32 %s147, 1
      %p151 = scmp.eq.s32.totalorder %s15, 1
      %p152 = scmp.ne.s32.totalorder %s147, %s149
      %p153 = scmp.eq.s32.totalorder %s15, 0
      %p154 = por %p152, %p153
      %p155 = scmp.ne.s32.totalorder %s147, %s149
      %p156 = scmp.eq.s32.totalorder %s20, 1
      %p157 = por %p155, %p156
      %p158 = scmp.ne.s32.totalorder %s149, %s150
      %p159 = scmp.eq.s32.totalorder %s20, 0
      %p160 = por %p158, %p159
      %p161 = scmp.ne.s32.totalorder %s149, %s150
      %p162 = scmp.eq.s32.totalorder %s21, 1
      %p163 = por %p161, %p162
      %p165 = scmp.ne.s32.totalorder %s150, %s164
      %p166 = scmp.eq.s32.totalorder %s21, 0
      %p167 = por %p165, %p166
      %s168 = ssub.s32 %s22, %s34
      %s169 = ssub.s32 %s23, %s30
      %s170 = sor.u32 %s168, %s169
      %p171 = scmp.eq.s32.totalorder %s170, 0
      %s173 = sadd.s32 %s172, 1
      %s174 = scalar_select %p171, %s172, %s173
      %p177 = pneg %p171
      %p178 = scmp.eq.s32.totalorder %s15, 1
      %p179 = por %p177, %p178
      %p180 = scmp.ne.s32.totalorder %s172, %s175
      %p181 = scmp.eq.s32.totalorder %s15, 0
      %p182 = por %p180, %p181
      %p183 = scmp.ne.s32.totalorder %s172, %s175
      %p184 = scmp.eq.s32.totalorder %s20, 1
      %p185 = por %p183, %p184
      %p186 = scmp.ne.s32.totalorder %s175, %s176
      %p187 = scmp.eq.s32.totalorder %s20, 0
      %p188 = por %p186, %p187
      %p189 = scmp.ne.s32.totalorder %s175, %s176
      %p190 = scmp.eq.s32.totalorder %s21, 1
      %p191 = por %p189, %p190
      %p193 = scmp.ne.s32.totalorder %s176, %s192
      %p194 = scmp.eq.s32.totalorder %s21, 0
      %p195 = por %p193, %p194
      %p196 = scmp.le.s32.totalorder 1, %s15
      %p197 = scmp.lt.s32.totalorder %s15, 3
      %p198 = pnand %p196, %p197
      %p199 = pneg %p198
      // Predicated region
      $region9: #{gn_forward.1} parent=5 // pred_check
        _
      $region10: #{gn_forward.1} parent=5 // pred_check_branch
        %201 = sbr.rel (%p198) target = $region12
      $region11: #{gn_forward.1} parent=5 // pred_region
        %s202 = ssub.s32 %s15, 1
        // Predicated region
        $region13: #{gn_forward.1} parent=11 // pred_check
          %p203 = pneg %p76
        $region14: #{gn_forward.1} parent=11 // pred_check_branch
          %205 = sbr.rel (%p203) target = $region16
        $region15: #{gn_forward.1} parent=11 // pred_region
          %s207 = ssub.s32 128, 128
          %208 = vsyncadd [#allocation3], %s207
          %s210 = sshll.u32 %s1, 4
          %s211 = int_to_ptr.vmem [resolvable:$true] %s210
          %213 = dma.vmem_to_smem %s211, 128, [#allocation2], [#allocation3]
        $region16: #{gn_forward.1} parent=11 // pred_fallthru
          _
        // Predicated region
        $region17: #{gn_forward.1} parent=11 // pred_check
          %p214 = pneg %p97
        $region18: #{gn_forward.1} parent=11 // pred_check_branch
          %216 = sbr.rel (%p214) target = $region20
        $region19: #{gn_forward.1} parent=11 // pred_region
          %s218 = ssub.s32 128, 128
          %219 = vsyncadd [#allocation5], %s218
          %s221 = sshll.u32 %s2, 4
          %s222 = int_to_ptr.vmem [resolvable:$true] %s221
          %224 = dma.vmem_to_smem %s222, 128, [#allocation4], [#allocation5]
        $region20: #{gn_forward.1} parent=11 // pred_fallthru
          _
        // Predicated region
        $region21: #{gn_forward.1} parent=11 // pred_check
          %p225 = pneg %p118
        $region22: #{gn_forward.1} parent=11 // pred_check_branch
          %227 = sbr.rel (%p225) target = $region24
        $region23: #{gn_forward.1} parent=11 // pred_region
          %s229 = ssub.s32 64, 64
          %230 = vsyncadd [#allocation5], %s229
          %s232 = sshll.u32 %s3, 4
          %s233 = int_to_ptr.vmem [resolvable:$true] %s232
          %235 = dma.vmem_to_smem %s233, 64, [#allocation6], [#allocation5]
        $region24: #{gn_forward.1} parent=11 // pred_fallthru
          _
        // Predicated region
        $region25: #{gn_forward.1} parent=11 // pred_check
          %p236 = pneg %p139
        $region26: #{gn_forward.1} parent=11 // pred_check_branch
          %238 = sbr.rel (%p236) target = $region28
        $region27: #{gn_forward.1} parent=11 // pred_region
          %s240 = ssub.s32 16, 16
          %241 = vsyncadd [#allocation8], %s240
          %s243 = sshll.u32 %s4, 4
          %s244 = int_to_ptr.vmem [resolvable:$true] %s243
          %246 = dma.vmem_to_smem %s244, 16, [#allocation7], [#allocation8]
        $region28: #{gn_forward.1} parent=11 // pred_fallthru
          _
        // Predicated region
        $region29: #{gn_forward.1} parent=11 // pred_check
          %p247 = pneg %p160
        $region30: #{gn_forward.1} parent=11 // pred_check_branch
          %249 = sbr.rel (%p247) target = $region32
        $region31: #{gn_forward.1} parent=11 // pred_region
          %s251 = ssub.s32 16, 16
          %252 = vsyncadd [#allocation8], %s251
          %s254 = sshll.u32 %s5, 4
          %s255 = int_to_ptr.vmem [resolvable:$true] %s254
          %257 = dma.vmem_to_smem %s255, 16, [#allocation9], [#allocation8]
        $region32: #{gn_forward.1} parent=11 // pred_fallthru
          _
      $region12: #{gn_forward.1} parent=5 // pred_fallthru
        _
      %p258 = scmp.lt.s32.totalorder %s15, 2
      // Predicated region
      $region33: #{gn_forward.1} parent=5 // pred_check
        %p259 = pneg %p258
      $region34: #{gn_forward.1} parent=5 // pred_check_branch
        %261 = sbr.rel (%p259) target = $region36
      $region35: #{gn_forward.1} parent=5 // pred_region
        // Predicated region
        $region37: #{gn_forward.1} parent=35 // pred_check
          %p262 = pneg %p49
        $region38: #{gn_forward.1} parent=35 // pred_check_branch
          %264 = sbr.rel (%p262) target = $region40
        $region39: #{gn_forward.1} parent=35 // pred_region
          %p265 = scmp.lt.s32.totalorder %s22, 1
          %s266 = scalar_select %p265, %s22, 1
          %p267 = scmp.lt.s32.totalorder %s23, 0
          %s268 = scalar_select %p267, %s23, 0
          %s269 = smul.addr %s266, 4
          %s270 = sadd.s32 %s268, %s269
          %s271 = smul.addr %s270, 2
          %s272 = scalar_lea.vmem %s0, %s271
        $region40: #{gn_forward.1} parent=35 // pred_fallthru
          _
      $region36: #{gn_forward.1} parent=5 // pred_fallthru
        _
      %p273 = scmp.le.s32.totalorder 1, %s15
      %p274 = scmp.lt.s32.totalorder %s15, 3
      %p275 = pnand %p273, %p274
      %p276 = pneg %p275
      // Predicated region
      $region41: #{gn_forward.1} parent=5 // pred_check
        _
      $region42: #{gn_forward.1} parent=5 // pred_check_branch
        %278 = sbr.rel (%p275) target = $region44
      $region43: #{gn_forward.1} parent=5 // pred_region
        %s279 = ssub.s32 %s15, 1
        // Predicated region
        $region45: #{gn_forward.1} parent=43 // pred_check
          %p280 = pneg %p76
        $region46: #{gn_forward.1} parent=43 // pred_check_branch
          %282 = sbr.rel (%p280) target = $region48
        $region47: #{gn_forward.1} parent=43 // pred_region
          %283 = dma.done [#allocation3], 128
        $region48: #{gn_forward.1} parent=43 // pred_fallthru
          _
        // Predicated region
        $region49: #{gn_forward.1} parent=43 // pred_check
          %p284 = pneg %p97
        $region50: #{gn_forward.1} parent=43 // pred_check_branch
          %286 = sbr.rel (%p284) target = $region52
        $region51: #{gn_forward.1} parent=43 // pred_region
          %287 = dma.done [#allocation5], 128
        $region52: #{gn_forward.1} parent=43 // pred_fallthru
          _
        // Predicated region
        $region53: #{gn_forward.1} parent=43 // pred_check
          %p288 = pneg %p118
        $region54: #{gn_forward.1} parent=43 // pred_check_branch
          %290 = sbr.rel (%p288) target = $region56
        $region55: #{gn_forward.1} parent=43 // pred_region
          %291 = dma.done [#allocation5], 64
        $region56: #{gn_forward.1} parent=43 // pred_fallthru
          _
        // Predicated region
        $region57: #{gn_forward.1} parent=43 // pred_check
          %p292 = pneg %p139
        $region58: #{gn_forward.1} parent=43 // pred_check_branch
          %294 = sbr.rel (%p292) target = $region60
        $region59: #{gn_forward.1} parent=43 // pred_region
          %295 = dma.done [#allocation8], 16
        $region60: #{gn_forward.1} parent=43 // pred_fallthru
          _
        // Predicated region
        $region61: #{gn_forward.1} parent=43 // pred_check
          %p296 = pneg %p160
        $region62: #{gn_forward.1} parent=43 // pred_check_branch
          %298 = sbr.rel (%p296) target = $region64
        $region63: #{gn_forward.1} parent=43 // pred_region
          %299 = dma.done [#allocation8], 16
        $region64: #{gn_forward.1} parent=43 // pred_fallthru
          _
        %300 = sfence
        %p301 = scmp.lt.s32.totalorder %s24, 1
        %s302 = scalar_select %p301, %s24, 1
        %p303 = scmp.lt.s32.totalorder %s25, 0
        %s304 = scalar_select %p303, %s25, 0
        %s305 = smul.addr %s302, 4
        %s306 = sadd.s32 %s304, %s305
        %s307 = smul.addr %s306, 2
        %s308 = scalar_lea.vmem %s0, %s307
        %p309 = pneg %p55
        %p310 = pneg %p52
        %p311 = pneg %p76
        %p312 = pneg %p73
        %p313 = pneg %p97
        %p314 = pneg %p94
        %p315 = pneg %p118
        %p316 = pneg %p115
        %p317 = pneg %p139
        %p318 = pneg %p136
        %p319 = pneg %p160
        %p320 = pneg %p157
        %p321 = pneg %p188
        %p322 = pneg %p185
        %p323 = scmp.lt.s32.totalorder %s24, 1
        %s324 = scalar_select %p323, %s24, 1
        %p325 = scmp.lt.s32.totalorder %s25, 0
        %s326 = scalar_select %p325, %s25, 0
        %s327 = smul.addr %s324, 4
        %s328 = sadd.s32 %s326, %s327
        %s329 = smul.addr %s328, 2
        %s330 = scalar_lea.vmem %s6, %s329
        %p331 = scmp.lt.s32.totalorder %s24, 1
        %s332 = scalar_select %p331, %s24, 1
        %p333 = scmp.lt.s32.totalorder %s25, 0
        %s334 = scalar_select %p333, %s25, 0
        %s335 = smul.addr %s332, 4
        %s336 = sadd.s32 %s334, %s335
        %s337 = smul.addr %s336, 2
        %s338 = scalar_lea.vmem %s0, %s337
        %p339 = scmp.lt.s32.totalorder %s24, 1
        %s340 = scalar_select %p339, %s24, 1
        %p341 = scmp.lt.s32.totalorder %s25, 0
        %s342 = scalar_select %p341, %s25, 0
        %s343 = smul.addr %s340, 4
        %s344 = sadd.s32 %s342, %s343
        %s345 = smul.addr %s344, 2
        %s346 = scalar_lea.vmem %s6, %s345
        %v347 = vld [vmem:[%s338] sm:$0x3]
        %s348 = scalar_lea.vmem %s338, 2
        %v349 = vld [vmem:[%s348] sm:$0x3]
        %s350 = scalar_lea.vmem %s338, 4
        %v351 = vld [vmem:[%s350] sm:$0x3]
        %s352 = scalar_lea.vmem %s338, 6
        %v353 = vld [vmem:[%s352] sm:$0x3]
        %v354 = vmul.f32 %v347, %v347
        %v355 = vadd.f32 %v347, %v349
        %v356 = vmul.f32 %v349, %v349
        %v357 = vadd.f32 %v354, %v356
        %v358 = vadd.f32 %v355, %v351
        %v359 = vmul.f32 %v351, %v351
        %v360 = vadd.f32 %v357, %v359
        %v361 = vadd.f32 %v358, %v353
        %v362 = vmul.f32 %v353, %v353
        %v363 = vadd.f32 %v360, %v362
        %v364 = vmul.f32 %v361, 0.25
        %v365 = vmul.f32 %v363, 0.25
        %v366 = vmul.f32 %v364, %v364
        %v367 = vsub.f32 %v365, %v366
        %v368 = vadd.f32 %v367, 1e-05
        %v369 = vrsqrt.pop %v368
        %v370 = vsub.f32 %v347, %v364
        %v371 = vmul.f32 %v370, %v369
        %v372 = vsub.f32 %v349, %v364
        %v373 = vmul.f32 %v372, %v369
        %v374 = vsub.f32 %v351, %v364
        %v375 = vmul.f32 %v374, %v369
        %v376 = vsub.f32 %v353, %v364
        %v377 = vmul.f32 %v376, %v369
        %s378 = sld [smem:[#allocation7]]
        %s379 = sld [smem:[#allocation2]]
        %v380 = vstv %s379
        %v381 = vmul.f32 %v380, %v371
        %v382 = vstv %s378
        %v383 = vadd.f32 %v382, %v381
        %s384 = sld [smem:[#allocation9]]
        %s385 = sld [smem:[#allocation4]]
        %v386 = vstv %s385
        %v387 = vmul.f32 %v386, %v371
        %v388 = vstv %s384
        %v389 = vadd.f32 %v388, %v387
        %s390 = sld [smem:[#allocation2 + $0x1]]
        %v391 = vstv %s390
        %v392 = vmul.f32 %v391, %v373
        %v393 = vadd.f32 %v383, %v392
        %s394 = sld [smem:[#allocation4 + $0x1]]
        %v395 = vstv %s394
        %v396 = vmul.f32 %v395, %v373
        %v397 = vadd.f32 %v389, %v396
        %s398 = sld [smem:[#allocation2 + $0x2]]
        %v399 = vstv %s398
        %v400 = vmul.f32 %v399, %v375
        %v401 = vadd.f32 %v393, %v400
        %s402 = sld [smem:[#allocation4 + $0x2]]
        %v403 = vstv %s402
        %v404 = vmul.f32 %v403, %v375
        %v405 = vadd.f32 %v397, %v404
        %s406 = sld [smem:[#allocation2 + $0x3]]
        %v407 = vstv %s406
        %v408 = vmul.f32 %v407, %v377
        %v409 = vadd.f32 %v401, %v408
        %s410 = sld [smem:[#allocation4 + $0x3]]
        %v411 = vstv %s410
        %v412 = vmul.f32 %v411, %v377
        %v413 = vadd.f32 %v405, %v412
        %v414 = vmul.f32 %v409, %v413
        %s415 = sld [smem:[#allocation7 + $0x1]]
        %s416 = sld [smem:[#allocation2 + $0x80]]
        %v417 = vstv %s416
        %v418 = vmul.f32 %v417, %v371
        %v419 = vstv %s415
        %v420 = vadd.f32 %v419, %v418
        %s421 = sld [smem:[#allocation9 + $0x1]]
        %s422 = sld [smem:[#allocation4 + $0x80]]
        %v423 = vstv %s422
        %v424 = vmul.f32 %v423, %v371
        %v425 = vstv %s421
        %v426 = vadd.f32 %v425, %v424
        %s427 = sld [smem:[#allocation2 + $0x81]]
        %v428 = vstv %s427
        %v429 = vmul.f32 %v428, %v373
        %v430 = vadd.f32 %v420, %v429
        %s431 = sld [smem:[#allocation4 + $0x81]]
        %v432 = vstv %s431
        %v433 = vmul.f32 %v432, %v373
        %v434 = vadd.f32 %v426, %v433
        %s435 = sld [smem:[#allocation2 + $0x82]]
        %v436 = vstv %s435
        %v437 = vmul.f32 %v436, %v375
        %v438 = vadd.f32 %v430, %v437
        %s439 = sld [smem:[#allocation4 + $0x82]]
        %v440 = vstv %s439
        %v441 = vmul.f32 %v440, %v375
        %v442 = vadd.f32 %v434, %v441
        %s443 = sld [smem:[#allocation2 + $0x83]]
        %v444 = vstv %s443
        %v445 = vmul.f32 %v444, %v377
        %v446 = vadd.f32 %v438, %v445
        %s447 = sld [smem:[#allocation4 + $0x83]]
        %v448 = vstv %s447
        %v449 = vmul.f32 %v448, %v377
        %v450 = vadd.f32 %v442, %v449
        %v451 = vmul.f32 %v446, %v450
        %s452 = sld [smem:[#allocation7 + $0x2]]
        %s453 = sld [smem:[#allocation2 + $0x100]]
        %v454 = vstv %s453
        %v455 = vmul.f32 %v454, %v371
        %v456 = vstv %s452
        %v457 = vadd.f32 %v456, %v455
        %s458 = sld [smem:[#allocation9 + $0x2]]
        %s459 = sld [smem:[#allocation4 + $0x100]]
        %v460 = vstv %s459
        %v461 = vmul.f32 %v460, %v371
        %v462 = vstv %s458
        %v463 = vadd.f32 %v462, %v461
        %s464 = sld [smem:[#allocation2 + $0x101]]
        %v465 = vstv %s464
        %v466 = vmul.f32 %v465, %v373
        %v467 = vadd.f32 %v457, %v466
        %s468 = sld [smem:[#allocation4 + $0x101]]
        %v469 = vstv %s468
        %v470 = vmul.f32 %v469, %v373
        %v471 = vadd.f32 %v463, %v470
        %s472 = sld [smem:[#allocation2 + $0x102]]
        %v473 = vstv %s472
        %v474 = vmul.f32 %v473, %v375
        %v475 = vadd.f32 %v467, %v474
        %s476 = sld [smem:[#allocation4 + $0x102]]
        %v477 = vstv %s476
        %v478 = vmul.f32 %v477, %v375
        %v479 = vadd.f32 %v471, %v478
        %s480 = sld [smem:[#allocation2 + $0x103]]
        %v481 = vstv %s480
        %v482 = vmul.f32 %v481, %v377
        %v483 = vadd.f32 %v475, %v482
        %s484 = sld [smem:[#allocation4 + $0x103]]
        %v485 = vstv %s484
        %v486 = vmul.f32 %v485, %v377
        %v487 = vadd.f32 %v479, %v486
        %v488 = vmul.f32 %v483, %v487
        %s489 = sld [smem:[#allocation7 + $0x3]]
        %s490 = sld [smem:[#allocation2 + $0x180]]
        %v491 = vstv %s490
        %v492 = vmul.f32 %v491, %v371
        %v493 = vstv %s489
        %v494 = vadd.f32 %v493, %v492
        %s495 = sld [smem:[#allocation9 + $0x3]]
        %s496 = sld [smem:[#allocation4 + $0x180]]
        %v497 = vstv %s496
        %v498 = vmul.f32 %v497, %v371
        %v499 = vstv %s495
        %v500 = vadd.f32 %v499, %v498
        %s501 = sld [smem:[#allocation2 + $0x181]]
        %v502 = vstv %s501
        %v503 = vmul.f32 %v502, %v373
        %v504 = vadd.f32 %v494, %v503
        %s505 = sld [smem:[#allocation4 + $0x181]]
        %v506 = vstv %s505
        %v507 = vmul.f32 %v506, %v373
        %v508 = vadd.f32 %v500, %v507
        %s509 = sld [smem:[#allocation2 + $0x182]]
        %v510 = vstv %s509
        %v511 = vmul.f32 %v510, %v375
        %v512 = vadd.f32 %v504, %v511
        %s513 = sld [smem:[#allocation4 + $0x182]]
        %v514 = vstv %s513
        %v515 = vmul.f32 %v514, %v375
        %v516 = vadd.f32 %v508, %v515
        %s517 = sld [smem:[#allocation2 + $0x183]]
        %v518 = vstv %s517
        %v519 = vmul.f32 %v518, %v377
        %v520 = vadd.f32 %v512, %v519
        %s521 = sld [smem:[#allocation4 + $0x183]]
        %v522 = vstv %s521
        %v523 = vmul.f32 %v522, %v377
        %v524 = vadd.f32 %v516, %v523
        %v525 = vmul.f32 %v520, %v524
        %s526 = sld [smem:[#allocation7 + $0x4]]
        %s527 = sld [smem:[#allocation2 + $0x200]]
        %v528 = vstv %s527
        %v529 = vmul.f32 %v528, %v371
        %v530 = vstv %s526
        %v531 = vadd.f32 %v530, %v529
        %s532 = sld [smem:[#allocation9 + $0x4]]
        %s533 = sld [smem:[#allocation4 + $0x200]]
        %v534 = vstv %s533
        %v535 = vmul.f32 %v534, %v371
        %v536 = vstv %s532
        %v537 = vadd.f32 %v536, %v535
        %s538 = sld [smem:[#allocation2 + $0x201]]
        %v539 = vstv %s538
        %v540 = vmul.f32 %v539, %v373
        %v541 = vadd.f32 %v531, %v540
        %s542 = sld [smem:[#allocation4 + $0x201]]
        %v543 = vstv %s542
        %v544 = vmul.f32 %v543, %v373
        %v545 = vadd.f32 %v537, %v544
        %s546 = sld [smem:[#allocation2 + $0x202]]
        %v547 = vstv %s546
        %v548 = vmul.f32 %v547, %v375
        %v549 = vadd.f32 %v541, %v548
        %s550 = sld [smem:[#allocation4 + $0x202]]
        %v551 = vstv %s550
        %v552 = vmul.f32 %v551, %v375
        %v553 = vadd.f32 %v545, %v552
        %s554 = sld [smem:[#allocation2 + $0x203]]
        %v555 = vstv %s554
        %v556 = vmul.f32 %v555, %v377
        %v557 = vadd.f32 %v549, %v556
        %s558 = sld [smem:[#allocation4 + $0x203]]
        %v559 = vstv %s558
        %v560 = vmul.f32 %v559, %v377
        %v561 = vadd.f32 %v553, %v560
        %v562 = vmul.f32 %v557, %v561
        %s563 = sld [smem:[#allocation7 + $0x5]]
        %s564 = sld [smem:[#allocation2 + $0x280]]
        %v565 = vstv %s564
        %v566 = vmul.f32 %v565, %v371
        %v567 = vstv %s563
        %v568 = vadd.f32 %v567, %v566
        %s569 = sld [smem:[#allocation9 + $0x5]]
        %s570 = sld [smem:[#allocation4 + $0x280]]
        %v571 = vstv %s570
        %v572 = vmul.f32 %v571, %v371
        %v573 = vstv %s569
        %v574 = vadd.f32 %v573, %v572
        %s575 = sld [smem:[#allocation2 + $0x281]]
        %v576 = vstv %s575
        %v577 = vmul.f32 %v576, %v373
        %v578 = vadd.f32 %v568, %v577
        %s579 = sld [smem:[#allocation4 + $0x281]]
        %v580 = vstv %s579
        %v581 = vmul.f32 %v580, %v373
        %v582 = vadd.f32 %v574, %v581
        %s583 = sld [smem:[#allocation2 + $0x282]]
        %v584 = vstv %s583
        %v585 = vmul.f32 %v584, %v375
        %v586 = vadd.f32 %v578, %v585
        %s587 = sld [smem:[#allocation4 + $0x282]]
        %v588 = vstv %s587
        %v589 = vmul.f32 %v588, %v375
        %v590 = vadd.f32 %v582, %v589
        %s591 = sld [smem:[#allocation2 + $0x283]]
        %v592 = vstv %s591
        %v593 = vmul.f32 %v592, %v377
        %v594 = vadd.f32 %v586, %v593
        %s595 = sld [smem:[#allocation4 + $0x283]]
        %v596 = vstv %s595
        %v597 = vmul.f32 %v596, %v377
        %v598 = vadd.f32 %v590, %v597
        %v599 = vmul.f32 %v594, %v598
        %s600 = sld [smem:[#allocation7 + $0x6]]
        %s601 = sld [smem:[#allocation2 + $0x300]]
        %v602 = vstv %s601
        %v603 = vmul.f32 %v602, %v371
        %v604 = vstv %s600
        %v605 = vadd.f32 %v604, %v603
        %s606 = sld [smem:[#allocation9 + $0x6]]
        %s607 = sld [smem:[#allocation4 + $0x300]]
        %v608 = vstv %s607
        %v609 = vmul.f32 %v608, %v371
        %v610 = vstv %s606
        %v611 = vadd.f32 %v610, %v609
        %s612 = sld [smem:[#allocation2 + $0x301]]
        %v613 = vstv %s612
        %v614 = vmul.f32 %v613, %v373
        %v615 = vadd.f32 %v605, %v614
        %s616 = sld [smem:[#allocation4 + $0x301]]
        %v617 = vstv %s616
        %v618 = vmul.f32 %v617, %v373
        %v619 = vadd.f32 %v611, %v618
        %s620 = sld [smem:[#allocation2 + $0x302]]
        %v621 = vstv %s620
        %v622 = vmul.f32 %v621, %v375
        %v623 = vadd.f32 %v615, %v622
        %s624 = sld [smem:[#allocation4 + $0x302]]
        %v625 = vstv %s624
        %v626 = vmul.f32 %v625, %v375
        %v627 = vadd.f32 %v619, %v626
        %s628 = sld [smem:[#allocation2 + $0x303]]
        %v629 = vstv %s628
        %v630 = vmul.f32 %v629, %v377
        %v631 = vadd.f32 %v623, %v630
        %s632 = sld [smem:[#allocation4 + $0x303]]
        %v633 = vstv %s632
        %v634 = vmul.f32 %v633, %v377
        %v635 = vadd.f32 %v627, %v634
        %v636 = vmul.f32 %v631, %v635
        %s637 = sld [smem:[#allocation7 + $0x7]]
        %s638 = sld [smem:[#allocation2 + $0x380]]
        %v639 = vstv %s638
        %v640 = vmul.f32 %v639, %v371
        %v641 = vstv %s637
        %v642 = vadd.f32 %v641, %v640
        %s643 = sld [smem:[#allocation9 + $0x7]]
        %s644 = sld [smem:[#allocation4 + $0x380]]
        %v645 = vstv %s644
        %v646 = vmul.f32 %v645, %v371
        %v647 = vstv %s643
        %v648 = vadd.f32 %v647, %v646
        %s649 = sld [smem:[#allocation2 + $0x381]]
        %v650 = vstv %s649
        %v651 = vmul.f32 %v650, %v373
        %v652 = vadd.f32 %v642, %v651
        %s653 = sld [smem:[#allocation4 + $0x381]]
        %v654 = vstv %s653
        %v655 = vmul.f32 %v654, %v373
        %v656 = vadd.f32 %v648, %v655
        %s657 = sld [smem:[#allocation2 + $0x382]]
        %v658 = vstv %s657
        %v659 = vmul.f32 %v658, %v375
        %v660 = vadd.f32 %v652, %v659
        %s661 = sld [smem:[#allocation4 + $0x382]]
        %v662 = vstv %s661
        %v663 = vmul.f32 %v662, %v375
        %v664 = vadd.f32 %v656, %v663
        %s665 = sld [smem:[#allocation2 + $0x383]]
        %v666 = vstv %s665
        %v667 = vmul.f32 %v666, %v377
        %v668 = vadd.f32 %v660, %v667
        %s669 = sld [smem:[#allocation4 + $0x383]]
        %v670 = vstv %s669
        %v671 = vmul.f32 %v670, %v377
        %v672 = vadd.f32 %v664, %v671
        %v673 = vmul.f32 %v668, %v672
        %s674 = sld [smem:[#allocation6]]
        %v675 = vstv %s674
        %v676 = vmul.f32 %v675, %v414
        %s677 = sld [smem:[#allocation6 + $0x1]]
        %v678 = vstv %s677
        %v679 = vmul.f32 %v678, %v451
        %v680 = vadd.f32 %v676, %v679
        %s681 = sld [smem:[#allocation6 + $0x2]]
        %v682 = vstv %s681
        %v683 = vmul.f32 %v682, %v488
        %v684 = vadd.f32 %v680, %v683
        %s685 = sld [smem:[#allocation6 + $0x3]]
        %v686 = vstv %s685
        %v687 = vmul.f32 %v686, %v525
        %v688 = vadd.f32 %v684, %v687
        %s689 = sld [smem:[#allocation6 + $0x4]]
        %v690 = vstv %s689
        %v691 = vmul.f32 %v690, %v562
        %v692 = vadd.f32 %v688, %v691
        %s693 = sld [smem:[#allocation6 + $0x5]]
        %v694 = vstv %s693
        %v695 = vmul.f32 %v694, %v599
        %v696 = vadd.f32 %v692, %v695
        %s697 = sld [smem:[#allocation6 + $0x6]]
        %v698 = vstv %s697
        %v699 = vmul.f32 %v698, %v636
        %v700 = vadd.f32 %v696, %v699
        %s701 = sld [smem:[#allocation6 + $0x7]]
        %v702 = vstv %s701
        %v703 = vmul.f32 %v702, %v673
        %v704 = vadd.f32 %v700, %v703
        %v705 = vadd.f32 %v347, %v704
        %706 = vst [vmem:[%s346] sm:$0x3] %v705
        %s707 = sld [smem:[#allocation6 + $0x80]]
        %v708 = vstv %s707
        %v709 = vmul.f32 %v708, %v414
        %s710 = sld [smem:[#allocation6 + $0x81]]
        %v711 = vstv %s710
        %v712 = vmul.f32 %v711, %v451
        %v713 = vadd.f32 %v709, %v712
        %s714 = sld [smem:[#allocation6 + $0x82]]
        %v715 = vstv %s714
        %v716 = vmul.f32 %v715, %v488
        %v717 = vadd.f32 %v713, %v716
        %s718 = sld [smem:[#allocation6 + $0x83]]
        %v719 = vstv %s718
        %v720 = vmul.f32 %v719, %v525
        %v721 = vadd.f32 %v717, %v720
        %s722 = sld [smem:[#allocation6 + $0x84]]
        %v723 = vstv %s722
        %v724 = vmul.f32 %v723, %v562
        %v725 = vadd.f32 %v721, %v724
        %s726 = sld [smem:[#allocation6 + $0x85]]
        %v727 = vstv %s726
        %v728 = vmul.f32 %v727, %v599
        %v729 = vadd.f32 %v725, %v728
        %s730 = sld [smem:[#allocation6 + $0x86]]
        %v731 = vstv %s730
        %v732 = vmul.f32 %v731, %v636
        %v733 = vadd.f32 %v729, %v732
        %s734 = sld [smem:[#allocation6 + $0x87]]
        %v735 = vstv %s734
        %v736 = vmul.f32 %v735, %v673
        %v737 = vadd.f32 %v733, %v736
        %v738 = vadd.f32 %v349, %v737
        %s739 = scalar_lea.vmem %s346, 2
        %740 = vst [vmem:[%s739] sm:$0x3] %v738
        %s741 = sld [smem:[#allocation6 + $0x100]]
        %v742 = vstv %s741
        %v743 = vmul.f32 %v742, %v414
        %s744 = sld [smem:[#allocation6 + $0x101]]
        %v745 = vstv %s744
        %v746 = vmul.f32 %v745, %v451
        %v747 = vadd.f32 %v743, %v746
        %s748 = sld [smem:[#allocation6 + $0x102]]
        %v749 = vstv %s748
        %v750 = vmul.f32 %v749, %v488
        %v751 = vadd.f32 %v747, %v750
        %s752 = sld [smem:[#allocation6 + $0x103]]
        %v753 = vstv %s752
        %v754 = vmul.f32 %v753, %v525
        %v755 = vadd.f32 %v751, %v754
        %s756 = sld [smem:[#allocation6 + $0x104]]
        %v757 = vstv %s756
        %v758 = vmul.f32 %v757, %v562
        %v759 = vadd.f32 %v755, %v758
        %s760 = sld [smem:[#allocation6 + $0x105]]
        %v761 = vstv %s760
        %v762 = vmul.f32 %v761, %v599
        %v763 = vadd.f32 %v759, %v762
        %s764 = sld [smem:[#allocation6 + $0x106]]
        %v765 = vstv %s764
        %v766 = vmul.f32 %v765, %v636
        %v767 = vadd.f32 %v763, %v766
        %s768 = sld [smem:[#allocation6 + $0x107]]
        %v769 = vstv %s768
        %v770 = vmul.f32 %v769, %v673
        %v771 = vadd.f32 %v767, %v770
        %v772 = vadd.f32 %v351, %v771
        %s773 = scalar_lea.vmem %s346, 4
        %774 = vst [vmem:[%s773] sm:$0x3] %v772
        %s775 = sld [smem:[#allocation6 + $0x180]]
        %v776 = vstv %s775
        %v777 = vmul.f32 %v776, %v414
        %s778 = sld [smem:[#allocation6 + $0x181]]
        %v779 = vstv %s778
        %v780 = vmul.f32 %v779, %v451
        %v781 = vadd.f32 %v777, %v780
        %s782 = sld [smem:[#allocation6 + $0x182]]
        %v783 = vstv %s782
        %v784 = vmul.f32 %v783, %v488
        %v785 = vadd.f32 %v781, %v784
        %s786 = sld [smem:[#allocation6 + $0x183]]
        %v787 = vstv %s786
        %v788 = vmul.f32 %v787, %v525
        %v789 = vadd.f32 %v785, %v788
        %s790 = sld [smem:[#allocation6 + $0x184]]
        %v791 = vstv %s790
        %v792 = vmul.f32 %v791, %v562
        %v793 = vadd.f32 %v789, %v792
        %s794 = sld [smem:[#allocation6 + $0x185]]
        %v795 = vstv %s794
        %v796 = vmul.f32 %v795, %v599
        %v797 = vadd.f32 %v793, %v796
        %s798 = sld [smem:[#allocation6 + $0x186]]
        %v799 = vstv %s798
        %v800 = vmul.f32 %v799, %v636
        %v801 = vadd.f32 %v797, %v800
        %s802 = sld [smem:[#allocation6 + $0x187]]
        %v803 = vstv %s802
        %v804 = vmul.f32 %v803, %v673
        %v805 = vadd.f32 %v801, %v804
        %v806 = vadd.f32 %v353, %v805
        %s807 = scalar_lea.vmem %s346, 6
        %808 = vst [vmem:[%s807] sm:$0x3] %v806
        %p809 = scmp.lt.s32.totalorder %s24, 1
        %s810 = scalar_select %p809, %s24, 1
        %p811 = scmp.lt.s32.totalorder %s25, 0
        %s812 = scalar_select %p811, %s25, 0
        %s813 = smul.addr %s810, 4
        %s814 = sadd.s32 %s812, %s813
        %s815 = smul.addr %s814, 2
        %s816 = scalar_lea.vmem %s6, %s815
        // Predicated region
        $region65: #{gn_forward.1} parent=43 // pred_check
          %p817 = pneg %p185
        $region66: #{gn_forward.1} parent=43 // pred_check_branch
          %819 = sbr.rel (%p817) target = $region68
        $region67: #{gn_forward.1} parent=43 // pred_region
          _
        $region68: #{gn_forward.1} parent=43 // pred_fallthru
          _
      $region44: #{gn_forward.1} parent=5 // pred_fallthru
        _
      %p820 = scmp.le.s32.totalorder 2, %s15
      // Predicated region
      $region69: #{gn_forward.1} parent=5 // pred_check
        %p821 = pneg %p820
      $region70: #{gn_forward.1} parent=5 // pred_check_branch
        %823 = sbr.rel (%p821) target = $region72
      $region71: #{gn_forward.1} parent=5 // pred_region
        %s824 = ssub.s32 %s15, 2
        // Predicated region
        $region73: #{gn_forward.1} parent=71 // pred_check
          %p825 = pneg %p191
        $region74: #{gn_forward.1} parent=71 // pred_check_branch
          %827 = sbr.rel (%p825) target = $region76
        $region75: #{gn_forward.1} parent=71 // pred_region
          %p828 = scmp.lt.s32.totalorder %s26, 1
          %s829 = scalar_select %p828, %s26, 1
          %p830 = scmp.lt.s32.totalorder %s27, 0
          %s831 = scalar_select %p830, %s27, 0
          %s832 = smul.addr %s829, 4
          %s833 = sadd.s32 %s831, %s832
          %s834 = smul.addr %s833, 2
          %s835 = scalar_lea.vmem %s6, %s834
        $region76: #{gn_forward.1} parent=71 // pred_fallthru
          _
      $region72: #{gn_forward.1} parent=5 // pred_fallthru
        _
    $region6: #{gn_forward.1} parent=1 // loop_footer
      %s19 = sadd.s32 1, %s15
    $region7: #{gn_forward.1} parent=1 // loop_footer_branch
      %14 = sbr.rel target = $region3
    $region8: #{gn_forward.1} parent=1 // loop_exit
      _
    %836 = vsyncpa [#allocation3], 1
    %s837 = scalar_lea.sflag [#allocation3], 1
    %838 = vsyncpa %s837, 1
    %839 = vsyncpa [#allocation5], 1
    %840 = vsyncpa [#allocation8], 1

</llo_original>
